<compile_context>
chip_gen: v5e
topology: v5e:2x2
jax: 0.10.0
libtpu: 0.0.40
codegen_flags: <defaults>
</compile_context>

<pallas_src>
import math
import jax
import jax.numpy as jnp
import numpy as np
from jax.experimental import pallas as pl
from jax.experimental.pallas import tpu as pltpu

# ----------------- small RoBERTa-like config -----------------
B = 2          # batch
L = 8          # sequence length
H = 32         # hidden_size
NH = 4         # num_attention_heads
DH = H // NH   # head dim
INTER = 64     # intermediate_size
NA = 4         # num_adapter
R = 16         # adp_intermediate_size (LoRA rank)
EPS = 1e-12    # layer_norm_eps
SCALING = 2.0  # LoRA scaling
NEG_INF = -1e9
T = B * L      # batch-flattened token count


def _gelu(x):
    # hidden_act taken as the tanh-approx GELU (maps to the EUP); the pure-JAX reference
    # uses the identical function.  (HF's default 'gelu' is the erf variant -> systematic
    # ~1e-3-level deviation if comparing against a real PyTorch checkpoint.)
    return jax.nn.gelu(x, approximate=True)


def _layer_norm(x, g, b):
    mu = jnp.mean(x, axis=-1, keepdims=True)
    c = x - mu
    var = jnp.mean(c * c, axis=-1, keepdims=True)
    return c * jax.lax.rsqrt(var + EPS) * g + b


# ----------------- Pallas kernel (single invocation, everything 2-D) -----------------
def moa_roberta_layer_kernel(
    x_ref,        # (T, H)        tokens, batch-flattened
    xrep_ref,     # (NH*T, H)     x tiled NH times along sublanes (wrapper-built)
    wq_ref, bq_ref,               # (H, H), (1, H)   (1/sqrt(DH) pre-folded)
    wk_ref, bk_ref,               # (H, H), (1, H)
    wv_ref, bv_ref,               # (H, H), (1, H)
    hmask_ref,    # (NH*T, H)     head-block-diagonal column mask (constant)
    amask_ref,    # (T, NH*T)     additive attention mask (padding + cross-batch block)
    bsum_ref,     # (NH*T, NH*T)  per-head block-sum matrix (constant)
    wo_ref, bo_ref,               # (H, H), (1, H)
    ln1_g_ref, ln1_b_ref,         # (1, H)
    wi_ref, bi_ref,               # (H, INTER), (1, INTER)
    wo2_ref, bo2_ref,             # (INTER, H), (1, H)
    ln2_g_ref, ln2_b_ref,         # (1, H)
    aw1_ref, ab1_ref,             # (H, B*R), (1, B*R)   per-batch adapter dense1, packed
    asel_ref,                     # (T, B*R)  per-token adapter-column selection mask
    aw2_ref, ab2_ref,             # (B*R, H), (T, H)     per-batch adapter dense2, packed
    out_ref,      # (T, H)
):
    f32 = jnp.float32
    x = x_ref[...]                # kept live: also the attention residual

    # --- Q projection (scale already folded into wq/bq in the wrapper) ---
    q = jnp.dot(x, wq_ref[...], preferred_element_type=f32) + bq_ref[...]          # (T, H)

    # --- K / V directly in stacked-head layout: row n*T+k keeps only head n's columns ---
    hmask = hmask_ref[...]
    x_rep = xrep_ref[...]
    k_exp = (jnp.dot(x_rep, wk_ref[...], preferred_element_type=f32) + bk_ref[...]) * hmask
    v_exp = (jnp.dot(x_rep, wv_ref[...], preferred_element_type=f32) + bv_ref[...]) * hmask

    # --- all heads' attention scores in one 2-D matmul: (T,H) x (NH*T,H)^T -> (T, NH*T) ---
    s = jnp.einsum('qc,jc->qj', q, k_exp, preferred_element_type=f32)
    s = s + amask_ref[...]
    # Subtracting the global row max is exact for the per-head softmax (same constant per
    # row) and avoids any per-head 3-D reshape.
    s = s - jnp.max(s, axis=-1, keepdims=True)
    e = jnp.exp(s)
    # Per-head denominators via one matmul against the constant block-sum matrix; exact
    # division (no approx reciprocal — EUP/VPU are nowhere near the binding slot here).
    denom = jnp.dot(e, bsum_ref[...], preferred_element_type=f32)
    p_attn = e / denom                                                              # (T, NH*T)

    # --- context for all heads (already concat-of-heads column layout) + out projection ---
    ctx = jnp.dot(p_attn, v_exp, preferred_element_type=f32)                        # (T, H)
    attn_dense = jnp.dot(ctx, wo_ref[...], preferred_element_type=f32) + bo_ref[...]
    attn_out = _layer_norm(attn_dense + x, ln1_g_ref[...], ln1_b_ref[...])

    # --- feed-forward ---
    inter = _gelu(jnp.dot(attn_out, wi_ref[...], preferred_element_type=f32) + bi_ref[...])
    ffn = jnp.dot(inter, wo2_ref[...], preferred_element_type=f32) + bo2_ref[...]
    layer_out = _layer_norm(ffn + attn_out, ln2_g_ref[...], ln2_b_ref[...])

    # --- LoRA_MD adapter (use_gate=False): per-batch domain weights were gathered in the
    # wrapper and packed block-diagonally; two plain 2-D matmuls + one selection mask. ---
    # TODO(synk): the use_gate=True NaiveGate top-k routing path is not implemented here
    # (the module is exercised with use_gate=False / per-batch domain_idx).
    h1 = _gelu(jnp.dot(attn_out, aw1_ref[...], preferred_element_type=f32) + ab1_ref[...])
    h1 = h1 * asel_ref[...]
    adp = jnp.dot(h1, aw2_ref[...], preferred_element_type=f32) + ab2_ref[...]

    out_ref[...] = layer_out + SCALING * adp


# ----------------- wrapper -----------------
def moa_roberta_layer(x, mask, domain_idx, p):
    f32 = jnp.float32
    inv_sqrt_dh = 1.0 / math.sqrt(DH)

    # ---- wrapper-side layout plumbing (plain JAX; outside the kernel) ----
    x_flat = x.reshape(T, H).astype(f32)
    x_rep = jnp.tile(x_flat, (NH, 1))                                     # (NH*T, H)

    wq_s = p['wq'] * inv_sqrt_dh                                          # fold 1/sqrt(DH)
    bq_s = p['bq'] * inv_sqrt_dh

    # Head-block-diagonal column mask: row n*T+k keeps only head n's hidden columns.
    head_of_row = jnp.repeat(jnp.arange(NH), T)                           # (NH*T,)
    head_of_col = jnp.arange(H) // DH                                     # (H,)
    hmask = (head_of_row[:, None] == head_of_col[None, :]).astype(f32)    # (NH*T, H)

    # Additive attention mask over batch-flattened tokens: per-key padding value inside a
    # batch, -1e9 across batches (those logits underflow to probability exactly 0), tiled
    # across heads along the stacked-key axis.
    key_add = mask[:, 0, :].reshape(T)                                    # (T,)
    tok_batch = jnp.repeat(jnp.arange(B), L)                              # (T,)
    same_batch = tok_batch[:, None] == tok_batch[None, :]
    amask_bt = jnp.where(same_batch, key_add[None, :], jnp.float32(NEG_INF))
    amask = jnp.tile(amask_bt, (1, NH)).astype(f32)                       # (T, NH*T)

    # Per-head block-sum matrix for the softmax denominators.
    blk = jnp.arange(NH * T) // T
    bsum = (blk[:, None] == blk[None, :]).astype(f32)                     # (NH*T, NH*T)

    # Adapter: gather the B needed domain weight sets (of NA) here, pack block-diagonally.
    aw1_g = p['aw1'][domain_idx]                                          # (B, H, R)
    ab1_g = p['ab1'][domain_idx]                                          # (B, 1, R)
    aw2_g = p['aw2'][domain_idx]                                          # (B, R, H)
    ab2_g = p['ab2'][domain_idx]                                          # (B, 1, H)
    aw1_cat = jnp.transpose(aw1_g, (1, 0, 2)).reshape(H, B * R)           # cols = (b, r)
    ab1_cat = ab1_g.reshape(1, B * R)
    aw2_bd = aw2_g.reshape(B * R, H)                                      # rows = (b, r)
    ab2_tok = ab2_g[tok_batch, 0, :]                                      # (T, H)
    col_batch = jnp.arange(B * R) // R
    adp_sel = (tok_batch[:, None] == col_batch[None, :]).astype(f32)      # (T, B*R)

    args = (x_flat, x_rep, wq_s, bq_s, p['wk'], p['bk'], p['wv'], p['bv'],
            hmask, amask, bsum,
            p['wo'], p['bo'], p['ln1_g'], p['ln1_b'],
            p['wi'], p['bi'], p['wo2'], p['bo2'], p['ln2_g'], p['ln2_b'],
            aw1_cat, ab1_cat, adp_sel, aw2_bd, ab2_tok)

    def full_spec(shape):
        nd = len(shape)
        return pl.BlockSpec(shape, lambda i: (0,) * nd)

    out_flat = pl.pallas_call(
        moa_roberta_layer_kernel,
        out_shape=jax.ShapeDtypeStruct((T, H), f32),
        grid=(1,),                                       # single invocation; all resident
        in_specs=[full_spec(a.shape) for a in args],
        out_specs=full_spec((T, H)),
        compiler_params=pltpu.CompilerParams(dimension_semantics=("arbitrary",)),
    )(*args)
    return out_flat.reshape(B, L, H)


# ----------------- pure-JAX reference -----------------
def reference_forward(x, mask, domain_idx, p):
    q = x @ p['wq'] + p['bq']
    k = x @ p['wk'] + p['bk']
    v = x @ p['wv'] + p['bv']
    qh = q.reshape(B, L, NH, DH).transpose(0, 2, 1, 3)
    kh = k.reshape(B, L, NH, DH).transpose(0, 2, 1, 3)
    vh = v.reshape(B, L, NH, DH).transpose(0, 2, 1, 3)
    s = jnp.einsum('bhqd,bhkd->bhqk', qh, kh) / math.sqrt(DH)
    s = s + mask[:, None, :, :]
    probs = jax.nn.softmax(s, axis=-1)
    ctx = jnp.einsum('bhqk,bhkd->bhqd', probs, vh).transpose(0, 2, 1, 3).reshape(B, L, H)
    attn_out = _layer_norm(ctx @ p['wo'] + p['bo'] + x, p['ln1_g'], p['ln1_b'])

    inter = _gelu(attn_out @ p['wi'] + p['bi'])
    layer_out = _layer_norm(inter @ p['wo2'] + p['bo2'] + attn_out, p['ln2_g'], p['ln2_b'])

    aw1 = p['aw1'][domain_idx]   # (B, H, R)
    ab1 = p['ab1'][domain_idx]   # (B, 1, R)
    aw2 = p['aw2'][domain_idx]   # (B, R, H)
    ab2 = p['ab2'][domain_idx]   # (B, 1, H)
    h1 = _gelu(jnp.einsum('blh,bhr->blr', attn_out, aw1) + ab1)
    adp = jnp.einsum('blr,brh->blh', h1, aw2) + ab2
    return layer_out + SCALING * adp


# ----------------- deterministic parameter init -----------------
def init_params(key):
    ks = jax.random.split(key, 24)
    w = lambda k, shape, s=0.05: (s * jax.random.normal(k, shape)).astype(jnp.float32)
    return {
        'wq': w(ks[0], (H, H)),      'bq': w(ks[1], (1, H), 0.01),
        'wk': w(ks[2], (H, H)),      'bk': w(ks[3], (1, H), 0.01),
        'wv': w(ks[4], (H, H)),      'bv': w(ks[5], (1, H), 0.01),
        'wo': w(ks[6], (H, H)),      'bo': w(ks[7], (1, H), 0.01),
        'ln1_g': (1.0 + w(ks[8], (1, H), 0.01)), 'ln1_b': w(ks[9], (1, H), 0.01),
        'wi': w(ks[10], (H, INTER)), 'bi': w(ks[11], (1, INTER), 0.01),
        'wo2': w(ks[12], (INTER, H)), 'bo2': w(ks[13], (1, H), 0.01),
        'ln2_g': (1.0 + w(ks[14], (1, H), 0.01)), 'ln2_b': w(ks[15], (1, H), 0.01),
        # LoRA_MD_Adapter params (NOTE: the module zero-inits dense2; random values are
        # used here so the adapter path is actually exercised numerically).
        'aw1': w(ks[16], (NA, H, R)), 'ab1': w(ks[17], (NA, 1, R), 0.01),
        'aw2': w(ks[18], (NA, R, H)), 'ab2': w(ks[19], (NA, 1, H), 0.01),
    }


if __name__ == "__main__":
    key = jax.random.PRNGKey(0)
    kx, kp = jax.random.split(key)
    params = init_params(kp)

    x = jax.random.normal(kx, (B, L, H), dtype=jnp.float32)
    # padding-style additive mask: batch 0 attends all 8 tokens, batch 1 only the first 6
    lens = jnp.array([L, L - 2])
    pos = jnp.arange(L)
    mask = jnp.where(pos[None, :] < lens[:, None], 0.0, NEG_INF).astype(jnp.float32)
    mask = mask[:, None, :]                          # (B, 1, L)
    domain_idx = jnp.array([1, 3], dtype=jnp.int32)  # adp_idx (one adapter per sample)

    out = moa_roberta_layer(x, mask, domain_idx, params)
    out = jax.block_until_ready(out)

    ref = reference_forward(x, mask, domain_idx, params)
    # Exact softmax reciprocal -> tolerance tightened vs. the previous approx-recip version
    # (remaining deltas are matmul precision/accumulation-order differences only).
    np.testing.assert_allclose(np.asarray(out), np.asarray(ref), rtol=1e-3, atol=1e-3)
    print("KERNEL_OK")
</pallas_src>

<mosaic_0001>
module attributes {stable_mosaic.version = 11 : i64} {
  func.func @moa_roberta_layer_kernel(%arg0: i32, %arg1: memref<16x32xf32, #tpu.memory_space<vmem>>, %arg2: memref<64x32xf32, #tpu.memory_space<vmem>>, %arg3: memref<32x32xf32, #tpu.memory_space<vmem>>, %arg4: memref<1x32xf32, #tpu.memory_space<vmem>>, %arg5: memref<32x32xf32, #tpu.memory_space<vmem>>, %arg6: memref<1x32xf32, #tpu.memory_space<vmem>>, %arg7: memref<32x32xf32, #tpu.memory_space<vmem>>, %arg8: memref<1x32xf32, #tpu.memory_space<vmem>>, %arg9: memref<64x32xf32, #tpu.memory_space<vmem>>, %arg10: memref<16x64xf32, #tpu.memory_space<vmem>>, %arg11: memref<64x64xf32, #tpu.memory_space<vmem>>, %arg12: memref<32x32xf32, #tpu.memory_space<vmem>>, %arg13: memref<1x32xf32, #tpu.memory_space<vmem>>, %arg14: memref<1x32xf32, #tpu.memory_space<vmem>>, %arg15: memref<1x32xf32, #tpu.memory_space<vmem>>, %arg16: memref<32x64xf32, #tpu.memory_space<vmem>>, %arg17: memref<1x64xf32, #tpu.memory_space<vmem>>, %arg18: memref<64x32xf32, #tpu.memory_space<vmem>>, %arg19: memref<1x32xf32, #tpu.memory_space<vmem>>, %arg20: memref<1x32xf32, #tpu.memory_space<vmem>>, %arg21: memref<1x32xf32, #tpu.memory_space<vmem>>, %arg22: memref<32x32xf32, #tpu.memory_space<vmem>>, %arg23: memref<1x32xf32, #tpu.memory_space<vmem>>, %arg24: memref<16x32xf32, #tpu.memory_space<vmem>>, %arg25: memref<32x32xf32, #tpu.memory_space<vmem>>, %arg26: memref<16x32xf32, #tpu.memory_space<vmem>>, %arg27: memref<16x32xf32, #tpu.memory_space<vmem>>) attributes {dimension_semantics = [#tpu.dimension_semantics<arbitrary>], iteration_bounds = array<i64: 1>, scalar_prefetch = 0 : i64, scratch_operands = 0 : i64, tpu.core_type = #tpu.core_type<tc>, window_params = [{pipeline_mode = #tpu.pipeline_mode<synchronous>, transform_indices = @transform_0, window_bounds = array<i64: 16, 32>}, {pipeline_mode = #tpu.pipeline_mode<synchronous>, transform_indices = @transform_1, window_bounds = array<i64: 64, 32>}, {pipeline_mode = #tpu.pipeline_mode<synchronous>, transform_indices = @transform_2, window_bounds = array<i64: 32, 32>}, {pipeline_mode = #tpu.pipeline_mode<synchronous>, transform_indices = @transform_3, window_bounds = array<i64: 1, 32>}, {pipeline_mode = #tpu.pipeline_mode<synchronous>, transform_indices = @transform_4, window_bounds = array<i64: 32, 32>}, {pipeline_mode = #tpu.pipeline_mode<synchronous>, transform_indices = @transform_5, window_bounds = array<i64: 1, 32>}, {pipeline_mode = #tpu.pipeline_mode<synchronous>, transform_indices = @transform_6, window_bounds = array<i64: 32, 32>}, {pipeline_mode = #tpu.pipeline_mode<synchronous>, transform_indices = @transform_7, window_bounds = array<i64: 1, 32>}, {pipeline_mode = #tpu.pipeline_mode<synchronous>, transform_indices = @transform_8, window_bounds = array<i64: 64, 32>}, {pipeline_mode = #tpu.pipeline_mode<synchronous>, transform_indices = @transform_9, window_bounds = array<i64: 16, 64>}, {pipeline_mode = #tpu.pipeline_mode<synchronous>, transform_indices = @transform_10, window_bounds = array<i64: 64, 64>}, {pipeline_mode = #tpu.pipeline_mode<synchronous>, transform_indices = @transform_11, window_bounds = array<i64: 32, 32>}, {pipeline_mode = #tpu.pipeline_mode<synchronous>, transform_indices = @transform_12, window_bounds = array<i64: 1, 32>}, {pipeline_mode = #tpu.pipeline_mode<synchronous>, transform_indices = @transform_13, window_bounds = array<i64: 1, 32>}, {pipeline_mode = #tpu.pipeline_mode<synchronous>, transform_indices = @transform_14, window_bounds = array<i64: 1, 32>}, {pipeline_mode = #tpu.pipeline_mode<synchronous>, transform_indices = @transform_15, window_bounds = array<i64: 32, 64>}, {pipeline_mode = #tpu.pipeline_mode<synchronous>, transform_indices = @transform_16, window_bounds = array<i64: 1, 64>}, {pipeline_mode = #tpu.pipeline_mode<synchronous>, transform_indices = @transform_17, window_bounds = array<i64: 64, 32>}, {pipeline_mode = #tpu.pipeline_mode<synchronous>, transform_indices = @transform_18, window_bounds = array<i64: 1, 32>}, {pipeline_mode = #tpu.pipeline_mode<synchronous>, transform_indices = @transform_19, window_bounds = array<i64: 1, 32>}, {pipeline_mode = #tpu.pipeline_mode<synchronous>, transform_indices = @transform_20, window_bounds = array<i64: 1, 32>}, {pipeline_mode = #tpu.pipeline_mode<synchronous>, transform_indices = @transform_21, window_bounds = array<i64: 32, 32>}, {pipeline_mode = #tpu.pipeline_mode<synchronous>, transform_indices = @transform_22, window_bounds = array<i64: 1, 32>}, {pipeline_mode = #tpu.pipeline_mode<synchronous>, transform_indices = @transform_23, window_bounds = array<i64: 16, 32>}, {pipeline_mode = #tpu.pipeline_mode<synchronous>, transform_indices = @transform_24, window_bounds = array<i64: 32, 32>}, {pipeline_mode = #tpu.pipeline_mode<synchronous>, transform_indices = @transform_25, window_bounds = array<i64: 16, 32>}, {pipeline_mode = #tpu.pipeline_mode<synchronous>, transform_indices = @transform_26, window_bounds = array<i64: 16, 32>}]} {
    %c0 = arith.constant 0 : index
    %c0_0 = arith.constant 0 : index
    %0 = vector.load %arg1[%c0, %c0_0] : memref<16x32xf32, #tpu.memory_space<vmem>>, vector<16x32xf32>
    %c0_1 = arith.constant 0 : index
    %c0_2 = arith.constant 0 : index
    %1 = vector.load %arg3[%c0_1, %c0_2] : memref<32x32xf32, #tpu.memory_space<vmem>>, vector<32x32xf32>
    %cst = arith.constant dense<0.000000e+00> : vector<16x32xf32>
    %2 = tpu.matmul %0, %1, %cst {dimension_numbers = #tpu.dot_dimension_numbers<[1], [0], [0], [1], [0, 0, 1, 1], [], []>} : vector<16x32xf32>, vector<32x32xf32>, vector<16x32xf32> -> vector<16x32xf32>
    %c0_3 = arith.constant 0 : index
    %c0_4 = arith.constant 0 : index
    %3 = vector.load %arg4[%c0_3, %c0_4] : memref<1x32xf32, #tpu.memory_space<vmem>>, vector<1x32xf32>
    %4 = vector.broadcast %3 : vector<1x32xf32> to vector<16x32xf32>
    %5 = arith.addf %2, %4 : vector<16x32xf32>
    %c0_5 = arith.constant 0 : index
    %c0_6 = arith.constant 0 : index
    %6 = vector.load %arg9[%c0_5, %c0_6] : memref<64x32xf32, #tpu.memory_space<vmem>>, vector<64x32xf32>
    %c0_7 = arith.constant 0 : index
    %c0_8 = arith.constant 0 : index
    %7 = vector.load %arg2[%c0_7, %c0_8] : memref<64x32xf32, #tpu.memory_space<vmem>>, vector<64x32xf32>
    %c0_9 = arith.constant 0 : index
    %c0_10 = arith.constant 0 : index
    %8 = vector.load %arg5[%c0_9, %c0_10] : memref<32x32xf32, #tpu.memory_space<vmem>>, vector<32x32xf32>
    %cst_11 = arith.constant dense<0.000000e+00> : vector<64x32xf32>
    %9 = tpu.matmul %7, %8, %cst_11 {dimension_numbers = #tpu.dot_dimension_numbers<[1], [0], [0], [1], [0, 0, 1, 1], [], []>} : vector<64x32xf32>, vector<32x32xf32>, vector<64x32xf32> -> vector<64x32xf32>
    %c0_12 = arith.constant 0 : index
    %c0_13 = arith.constant 0 : index
    %10 = vector.load %arg6[%c0_12, %c0_13] : memref<1x32xf32, #tpu.memory_space<vmem>>, vector<1x32xf32>
    %11 = vector.broadcast %10 : vector<1x32xf32> to vector<64x32xf32>
    %12 = arith.addf %9, %11 : vector<64x32xf32>
    %13 = arith.mulf %12, %6 : vector<64x32xf32>
    %c0_14 = arith.constant 0 : index
    %c0_15 = arith.constant 0 : index
    %14 = vector.load %arg7[%c0_14, %c0_15] : memref<32x32xf32, #tpu.memory_space<vmem>>, vector<32x32xf32>
    %cst_16 = arith.constant dense<0.000000e+00> : vector<64x32xf32>
    %15 = tpu.matmul %7, %14, %cst_16 {dimension_numbers = #tpu.dot_dimension_numbers<[1], [0], [0], [1], [0, 0, 1, 1], [], []>} : vector<64x32xf32>, vector<32x32xf32>, vector<64x32xf32> -> vector<64x32xf32>
    %c0_17 = arith.constant 0 : index
    %c0_18 = arith.constant 0 : index
    %16 = vector.load %arg8[%c0_17, %c0_18] : memref<1x32xf32, #tpu.memory_space<vmem>>, vector<1x32xf32>
    %17 = vector.broadcast %16 : vector<1x32xf32> to vector<64x32xf32>
    %18 = arith.addf %15, %17 : vector<64x32xf32>
    %19 = arith.mulf %18, %6 : vector<64x32xf32>
    "tpu.trace_start"() <{level = 10 : i32, message = "qc,jc->qj"}> : () -> ()
    %cst_19 = arith.constant dense<0.000000e+00> : vector<16x64xf32>
    %20 = tpu.matmul %5, %13, %cst_19 {dimension_numbers = #tpu.dot_dimension_numbers<[1], [1], [0], [0], [0, 0, 1, 0], [], []>} : vector<16x32xf32>, vector<64x32xf32>, vector<16x64xf32> -> vector<16x64xf32>
    "tpu.trace_stop"() : () -> ()
    %c0_20 = arith.constant 0 : index
    %c0_21 = arith.constant 0 : index
    %21 = vector.load %arg10[%c0_20, %c0_21] : memref<16x64xf32, #tpu.memory_space<vmem>>, vector<16x64xf32>
    %22 = arith.addf %20, %21 : vector<16x64xf32>
    %cst_22 = arith.constant dense<0xFF800000> : vector<16xf32>
    %23 = vector.multi_reduction <maximumf>, %22, %cst_22 [1] : vector<16x64xf32> to vector<16xf32>
    %24 = vector.shape_cast %23 : vector<16xf32> to vector<16x1xf32>
    %25 = vector.broadcast %24 : vector<16x1xf32> to vector<16x64xf32>
    %26 = arith.subf %22, %25 : vector<16x64xf32>
    %27 = math.exp %26 : vector<16x64xf32>
    %c0_23 = arith.constant 0 : index
    %c0_24 = arith.constant 0 : index
    %28 = vector.load %arg11[%c0_23, %c0_24] : memref<64x64xf32, #tpu.memory_space<vmem>>, vector<64x64xf32>
    %cst_25 = arith.constant dense<0.000000e+00> : vector<16x64xf32>
    %29 = tpu.matmul %27, %28, %cst_25 {dimension_numbers = #tpu.dot_dimension_numbers<[1], [0], [0], [1], [0, 0, 1, 1], [], []>} : vector<16x64xf32>, vector<64x64xf32>, vector<16x64xf32> -> vector<16x64xf32>
    %30 = arith.divf %27, %29 : vector<16x64xf32>
    %cst_26 = arith.constant dense<0.000000e+00> : vector<16x32xf32>
    %31 = tpu.matmul %30, %19, %cst_26 {dimension_numbers = #tpu.dot_dimension_numbers<[1], [0], [0], [1], [0, 0, 1, 1], [], []>} : vector<16x64xf32>, vector<64x32xf32>, vector<16x32xf32> -> vector<16x32xf32>
    %c0_27 = arith.constant 0 : index
    %c0_28 = arith.constant 0 : index
    %32 = vector.load %arg12[%c0_27, %c0_28] : memref<32x32xf32, #tpu.memory_space<vmem>>, vector<32x32xf32>
    %cst_29 = arith.constant dense<0.000000e+00> : vector<16x32xf32>
    %33 = tpu.matmul %31, %32, %cst_29 {dimension_numbers = #tpu.dot_dimension_numbers<[1], [0], [0], [1], [0, 0, 1, 1], [], []>} : vector<16x32xf32>, vector<32x32xf32>, vector<16x32xf32> -> vector<16x32xf32>
    %c0_30 = arith.constant 0 : index
    %c0_31 = arith.constant 0 : index
    %34 = vector.load %arg13[%c0_30, %c0_31] : memref<1x32xf32, #tpu.memory_space<vmem>>, vector<1x32xf32>
    %35 = vector.broadcast %34 : vector<1x32xf32> to vector<16x32xf32>
    %36 = arith.addf %33, %35 : vector<16x32xf32>
    %37 = arith.addf %36, %0 : vector<16x32xf32>
    %c0_32 = arith.constant 0 : index
    %c0_33 = arith.constant 0 : index
    %38 = vector.load %arg14[%c0_32, %c0_33] : memref<1x32xf32, #tpu.memory_space<vmem>>, vector<1x32xf32>
    %c0_34 = arith.constant 0 : index
    %c0_35 = arith.constant 0 : index
    %39 = vector.load %arg15[%c0_34, %c0_35] : memref<1x32xf32, #tpu.memory_space<vmem>>, vector<1x32xf32>
    %cst_36 = arith.constant dense<0.000000e+00> : vector<16xf32>
    %40 = vector.multi_reduction <add>, %37, %cst_36 [1] : vector<16x32xf32> to vector<16xf32>
    %41 = vector.shape_cast %40 : vector<16xf32> to vector<16x1xf32>
    %cst_37 = arith.constant 3.200000e+01 : f32
    %42 = vector.broadcast %cst_37 : f32 to vector<16x1xf32>
    %43 = arith.divf %41, %42 : vector<16x1xf32>
    %44 = vector.broadcast %43 : vector<16x1xf32> to vector<16x32xf32>
    %45 = arith.subf %37, %44 : vector<16x32xf32>
    %46 = arith.mulf %45, %45 : vector<16x32xf32>
    %cst_38 = arith.constant dense<0.000000e+00> : vector<16xf32>
    %47 = vector.multi_reduction <add>, %46, %cst_38 [1] : vector<16x32xf32> to vector<16xf32>
    %48 = vector.shape_cast %47 : vector<16xf32> to vector<16x1xf32>
    %cst_39 = arith.constant 3.200000e+01 : f32
    %49 = vector.broadcast %cst_39 : f32 to vector<16x1xf32>
    %50 = arith.divf %48, %49 : vector<16x1xf32>
    %cst_40 = arith.constant 9.99999996E-13 : f32
    %51 = vector.broadcast %cst_40 : f32 to vector<16x1xf32>
    %52 = arith.addf %50, %51 : vector<16x1xf32>
    %53 = math.rsqrt %52 : vector<16x1xf32>
    %54 = vector.broadcast %53 : vector<16x1xf32> to vector<16x32xf32>
    %55 = arith.mulf %45, %54 : vector<16x32xf32>
    %56 = vector.broadcast %38 : vector<1x32xf32> to vector<16x32xf32>
    %57 = arith.mulf %55, %56 : vector<16x32xf32>
    %58 = vector.broadcast %39 : vector<1x32xf32> to vector<16x32xf32>
    %59 = arith.addf %57, %58 : vector<16x32xf32>
    %c0_41 = arith.constant 0 : index
    %c0_42 = arith.constant 0 : index
    %60 = vector.load %arg16[%c0_41, %c0_42] : memref<32x64xf32, #tpu.memory_space<vmem>>, vector<32x64xf32>
    %cst_43 = arith.constant dense<0.000000e+00> : vector<16x64xf32>
    %61 = tpu.matmul %59, %60, %cst_43 {dimension_numbers = #tpu.dot_dimension_numbers<[1], [0], [0], [1], [0, 0, 1, 1], [], []>} : vector<16x32xf32>, vector<32x64xf32>, vector<16x64xf32> -> vector<16x64xf32>
    %c0_44 = arith.constant 0 : index
    %c0_45 = arith.constant 0 : index
    %62 = vector.load %arg17[%c0_44, %c0_45] : memref<1x64xf32, #tpu.memory_space<vmem>>, vector<1x64xf32>
    %63 = vector.broadcast %62 : vector<1x64xf32> to vector<16x64xf32>
    %64 = arith.addf %61, %63 : vector<16x64xf32>
    %65 = arith.mulf %64, %64 : vector<16x64xf32>
    %66 = arith.mulf %64, %65 : vector<16x64xf32>
    %cst_46 = arith.constant 4.471500e-02 : f32
    %67 = vector.broadcast %cst_46 : f32 to vector<16x64xf32>
    %68 = arith.mulf %67, %66 : vector<16x64xf32>
    %69 = arith.addf %64, %68 : vector<16x64xf32>
    %cst_47 = arith.constant 0.797884583 : f32
    %70 = vector.broadcast %cst_47 : f32 to vector<16x64xf32>
    %71 = arith.mulf %70, %69 : vector<16x64xf32>
    %72 = math.tanh %71 : vector<16x64xf32>
    %cst_48 = arith.constant 1.000000e+00 : f32
    %73 = vector.broadcast %cst_48 : f32 to vector<16x64xf32>
    %74 = arith.addf %73, %72 : vector<16x64xf32>
    %cst_49 = arith.constant 5.000000e-01 : f32
    %75 = vector.broadcast %cst_49 : f32 to vector<16x64xf32>
    %76 = arith.mulf %75, %74 : vector<16x64xf32>
    %77 = arith.mulf %64, %76 : vector<16x64xf32>
    %c0_50 = arith.constant 0 : index
    %c0_51 = arith.constant 0 : index
    %78 = vector.load %arg18[%c0_50, %c0_51] : memref<64x32xf32, #tpu.memory_space<vmem>>, vector<64x32xf32>
    %cst_52 = arith.constant dense<0.000000e+00> : vector<16x32xf32>
    %79 = tpu.matmul %77, %78, %cst_52 {dimension_numbers = #tpu.dot_dimension_numbers<[1], [0], [0], [1], [0, 0, 1, 1], [], []>} : vector<16x64xf32>, vector<64x32xf32>, vector<16x32xf32> -> vector<16x32xf32>
    %c0_53 = arith.constant 0 : index
    %c0_54 = arith.constant 0 : index
    %80 = vector.load %arg19[%c0_53, %c0_54] : memref<1x32xf32, #tpu.memory_space<vmem>>, vector<1x32xf32>
    %81 = vector.broadcast %80 : vector<1x32xf32> to vector<16x32xf32>
    %82 = arith.addf %79, %81 : vector<16x32xf32>
    %83 = arith.addf %82, %59 : vector<16x32xf32>
    %c0_55 = arith.constant 0 : index
    %c0_56 = arith.constant 0 : index
    %84 = vector.load %arg20[%c0_55, %c0_56] : memref<1x32xf32, #tpu.memory_space<vmem>>, vector<1x32xf32>
    %c0_57 = arith.constant 0 : index
    %c0_58 = arith.constant 0 : index
    %85 = vector.load %arg21[%c0_57, %c0_58] : memref<1x32xf32, #tpu.memory_space<vmem>>, vector<1x32xf32>
    %cst_59 = arith.constant dense<0.000000e+00> : vector<16xf32>
    %86 = vector.multi_reduction <add>, %83, %cst_59 [1] : vector<16x32xf32> to vector<16xf32>
    %87 = vector.shape_cast %86 : vector<16xf32> to vector<16x1xf32>
    %cst_60 = arith.constant 3.200000e+01 : f32
    %88 = vector.broadcast %cst_60 : f32 to vector<16x1xf32>
    %89 = arith.divf %87, %88 : vector<16x1xf32>
    %90 = vector.broadcast %89 : vector<16x1xf32> to vector<16x32xf32>
    %91 = arith.subf %83, %90 : vector<16x32xf32>
    %92 = arith.mulf %91, %91 : vector<16x32xf32>
    %cst_61 = arith.constant dense<0.000000e+00> : vector<16xf32>
    %93 = vector.multi_reduction <add>, %92, %cst_61 [1] : vector<16x32xf32> to vector<16xf32>
    %94 = vector.shape_cast %93 : vector<16xf32> to vector<16x1xf32>
    %cst_62 = arith.constant 3.200000e+01 : f32
    %95 = vector.broadcast %cst_62 : f32 to vector<16x1xf32>
    %96 = arith.divf %94, %95 : vector<16x1xf32>
    %cst_63 = arith.constant 9.99999996E-13 : f32
    %97 = vector.broadcast %cst_63 : f32 to vector<16x1xf32>
    %98 = arith.addf %96, %97 : vector<16x1xf32>
    %99 = math.rsqrt %98 : vector<16x1xf32>
    %100 = vector.broadcast %99 : vector<16x1xf32> to vector<16x32xf32>
    %101 = arith.mulf %91, %100 : vector<16x32xf32>
    %102 = vector.broadcast %84 : vector<1x32xf32> to vector<16x32xf32>
    %103 = arith.mulf %101, %102 : vector<16x32xf32>
    %104 = vector.broadcast %85 : vector<1x32xf32> to vector<16x32xf32>
    %105 = arith.addf %103, %104 : vector<16x32xf32>
    %c0_64 = arith.constant 0 : index
    %c0_65 = arith.constant 0 : index
    %106 = vector.load %arg22[%c0_64, %c0_65] : memref<32x32xf32, #tpu.memory_space<vmem>>, vector<32x32xf32>
    %cst_66 = arith.constant dense<0.000000e+00> : vector<16x32xf32>
    %107 = tpu.matmul %59, %106, %cst_66 {dimension_numbers = #tpu.dot_dimension_numbers<[1], [0], [0], [1], [0, 0, 1, 1], [], []>} : vector<16x32xf32>, vector<32x32xf32>, vector<16x32xf32> -> vector<16x32xf32>
    %c0_67 = arith.constant 0 : index
    %c0_68 = arith.constant 0 : index
    %108 = vector.load %arg23[%c0_67, %c0_68] : memref<1x32xf32, #tpu.memory_space<vmem>>, vector<1x32xf32>
    %109 = vector.broadcast %108 : vector<1x32xf32> to vector<16x32xf32>
    %110 = arith.addf %107, %109 : vector<16x32xf32>
    %111 = arith.mulf %110, %110 : vector<16x32xf32>
    %112 = arith.mulf %110, %111 : vector<16x32xf32>
    %cst_69 = arith.constant 4.471500e-02 : f32
    %113 = vector.broadcast %cst_69 : f32 to vector<16x32xf32>
    %114 = arith.mulf %113, %112 : vector<16x32xf32>
    %115 = arith.addf %110, %114 : vector<16x32xf32>
    %cst_70 = arith.constant 0.797884583 : f32
    %116 = vector.broadcast %cst_70 : f32 to vector<16x32xf32>
    %117 = arith.mulf %116, %115 : vector<16x32xf32>
    %118 = math.tanh %117 : vector<16x32xf32>
    %cst_71 = arith.constant 1.000000e+00 : f32
    %119 = vector.broadcast %cst_71 : f32 to vector<16x32xf32>
    %120 = arith.addf %119, %118 : vector<16x32xf32>
    %cst_72 = arith.constant 5.000000e-01 : f32
    %121 = vector.broadcast %cst_72 : f32 to vector<16x32xf32>
    %122 = arith.mulf %121, %120 : vector<16x32xf32>
    %123 = arith.mulf %110, %122 : vector<16x32xf32>
    %c0_73 = arith.constant 0 : index
    %c0_74 = arith.constant 0 : index
    %124 = vector.load %arg24[%c0_73, %c0_74] : memref<16x32xf32, #tpu.memory_space<vmem>>, vector<16x32xf32>
    %125 = arith.mulf %123, %124 : vector<16x32xf32>
    %c0_75 = arith.constant 0 : index
    %c0_76 = arith.constant 0 : index
    %126 = vector.load %arg25[%c0_75, %c0_76] : memref<32x32xf32, #tpu.memory_space<vmem>>, vector<32x32xf32>
    %cst_77 = arith.constant dense<0.000000e+00> : vector<16x32xf32>
    %127 = tpu.matmul %125, %126, %cst_77 {dimension_numbers = #tpu.dot_dimension_numbers<[1], [0], [0], [1], [0, 0, 1, 1], [], []>} : vector<16x32xf32>, vector<32x32xf32>, vector<16x32xf32> -> vector<16x32xf32>
    %c0_78 = arith.constant 0 : index
    %c0_79 = arith.constant 0 : index
    %128 = vector.load %arg26[%c0_78, %c0_79] : memref<16x32xf32, #tpu.memory_space<vmem>>, vector<16x32xf32>
    %129 = arith.addf %127, %128 : vector<16x32xf32>
    %cst_80 = arith.constant 2.000000e+00 : f32
    %130 = vector.broadcast %cst_80 : f32 to vector<16x32xf32>
    %131 = arith.mulf %130, %129 : vector<16x32xf32>
    %132 = arith.addf %105, %131 : vector<16x32xf32>
    %c0_81 = arith.constant 0 : index
    %c0_82 = arith.constant 0 : index
    %133 = vector.load %arg27[%c0_81, %c0_82] : memref<16x32xf32, #tpu.memory_space<vmem>>, vector<16x32xf32>
    tpu.vector_store %arg27[%c0_81, %c0_82], %132 {strides = array<i32>} : memref<16x32xf32, #tpu.memory_space<vmem>>, vector<16x32xf32>,
    return
  }
  func.func @transform_0(%arg0: i32) -> (i32, i32) {
    %c0_i32 = arith.constant 0 : i32
    %c0_i32_0 = arith.constant 0 : i32
    %c0_i32_1 = arith.constant 0 : i32
    return %c0_i32, %c0_i32_0 : i32, i32
  }
  func.func @transform_1(%arg0: i32) -> (i32, i32) {
    %c0_i32 = arith.constant 0 : i32
    %c0_i32_0 = arith.constant 0 : i32
    %c0_i32_1 = arith.constant 0 : i32
    return %c0_i32, %c0_i32_0 : i32, i32
  }
  func.func @transform_2(%arg0: i32) -> (i32, i32) {
    %c0_i32 = arith.constant 0 : i32
    %c0_i32_0 = arith.constant 0 : i32
    %c0_i32_1 = arith.constant 0 : i32
    return %c0_i32, %c0_i32_0 : i32, i32
  }
  func.func @transform_3(%arg0: i32) -> (i32, i32) {
    %c0_i32 = arith.constant 0 : i32
    %c0_i32_0 = arith.constant 0 : i32
    %c0_i32_1 = arith.constant 0 : i32
    return %c0_i32, %c0_i32_0 : i32, i32
  }
  func.func @transform_4(%arg0: i32) -> (i32, i32) {
    %c0_i32 = arith.constant 0 : i32
    %c0_i32_0 = arith.constant 0 : i32
    %c0_i32_1 = arith.constant 0 : i32
    return %c0_i32, %c0_i32_0 : i32, i32
  }
  func.func @transform_5(%arg0: i32) -> (i32, i32) {
    %c0_i32 = arith.constant 0 : i32
    %c0_i32_0 = arith.constant 0 : i32
    %c0_i32_1 = arith.constant 0 : i32
    return %c0_i32, %c0_i32_0 : i32, i32
  }
  func.func @transform_6(%arg0: i32) -> (i32, i32) {
    %c0_i32 = arith.constant 0 : i32
    %c0_i32_0 = arith.constant 0 : i32
    %c0_i32_1 = arith.constant 0 : i32
    return %c0_i32, %c0_i32_0 : i32, i32
  }
  func.func @transform_7(%arg0: i32) -> (i32, i32) {
    %c0_i32 = arith.constant 0 : i32
    %c0_i32_0 = arith.constant 0 : i32
    %c0_i32_1 = arith.constant 0 : i32
    return %c0_i32, %c0_i32_0 : i32, i32
  }
  func.func @transform_8(%arg0: i32) -> (i32, i32) {
    %c0_i32 = arith.constant 0 : i32
    %c0_i32_0 = arith.constant 0 : i32
    %c0_i32_1 = arith.constant 0 : i32
    return %c0_i32, %c0_i32_0 : i32, i32
  }
  func.func @transform_9(%arg0: i32) -> (i32, i32) {
    %c0_i32 = arith.constant 0 : i32
    %c0_i32_0 = arith.constant 0 : i32
    %c0_i32_1 = arith.constant 0 : i32
    return %c0_i32, %c0_i32_0 : i32, i32
  }
  func.func @transform_10(%arg0: i32) -> (i32, i32) {
    %c0_i32 = arith.constant 0 : i32
    %c0_i32_0 = arith.constant 0 : i32
    %c0_i32_1 = arith.constant 0 : i32
    return %c0_i32, %c0_i32_0 : i32, i32
  }
  func.func @transform_11(%arg0: i32) -> (i32, i32) {
    %c0_i32 = arith.constant 0 : i32
    %c0_i32_0 = arith.constant 0 : i32
    %c0_i32_1 = arith.constant 0 : i32
    return %c0_i32, %c0_i32_0 : i32, i32
  }
  func.func @transform_12(%arg0: i32) -> (i32, i32) {
    %c0_i32 = arith.constant 0 : i32
    %c0_i32_0 = arith.constant 0 : i32
    %c0_i32_1 = arith.constant 0 : i32
    return %c0_i32, %c0_i32_0 : i32, i32
  }
  func.func @transform_13(%arg0: i32) -> (i32, i32) {
    %c0_i32 = arith.constant 0 : i32
    %c0_i32_0 = arith.constant 0 : i32
    %c0_i32_1 = arith.constant 0 : i32
    return %c0_i32, %c0_i32_0 : i32, i32
  }
  func.func @transform_14(%arg0: i32) -> (i32, i32) {
    %c0_i32 = arith.constant 0 : i32
    %c0_i32_0 = arith.constant 0 : i32
    %c0_i32_1 = arith.constant 0 : i32
    return %c0_i32, %c0_i32_0 : i32, i32
  }
  func.func @transform_15(%arg0: i32) -> (i32, i32) {
    %c0_i32 = arith.constant 0 : i32
    %c0_i32_0 = arith.constant 0 : i32
    %c0_i32_1 = arith.constant 0 : i32
    return %c0_i32, %c0_i32_0 : i32, i32
  }
  func.func @transform_16(%arg0: i32) -> (i32, i32) {
    %c0_i32 = arith.constant 0 : i32
    %c0_i32_0 = arith.constant 0 : i32
    %c0_i32_1 = arith.constant 0 : i32
    return %c0_i32, %c0_i32_0 : i32, i32
  }
  func.func @transform_17(%arg0: i32) -> (i32, i32) {
    %c0_i32 = arith.constant 0 : i32
    %c0_i32_0 = arith.constant 0 : i32
    %c0_i32_1 = arith.constant 0 : i32
    return %c0_i32, %c0_i32_0 : i32, i32
  }
  func.func @transform_18(%arg0: i32) -> (i32, i32) {
    %c0_i32 = arith.constant 0 : i32
    %c0_i32_0 = arith.constant 0 : i32
    %c0_i32_1 = arith.constant 0 : i32
    return %c0_i32, %c0_i32_0 : i32, i32
  }
  func.func @transform_19(%arg0: i32) -> (i32, i32) {
    %c0_i32 = arith.constant 0 : i32
    %c0_i32_0 = arith.constant 0 : i32
    %c0_i32_1 = arith.constant 0 : i32
    return %c0_i32, %c0_i32_0 : i32, i32
  }
  func.func @transform_20(%arg0: i32) -> (i32, i32) {
    %c0_i32 = arith.constant 0 : i32
    %c0_i32_0 = arith.constant 0 : i32
    %c0_i32_1 = arith.constant 0 : i32
    return %c0_i32, %c0_i32_0 : i32, i32
  }
  func.func @transform_21(%arg0: i32) -> (i32, i32) {
    %c0_i32 = arith.constant 0 : i32
    %c0_i32_0 = arith.constant 0 : i32
    %c0_i32_1 = arith.constant 0 : i32
    return %c0_i32, %c0_i32_0 : i32, i32
  }
  func.func @transform_22(%arg0: i32) -> (i32, i32) {
    %c0_i32 = arith.constant 0 : i32
    %c0_i32_0 = arith.constant 0 : i32
    %c0_i32_1 = arith.constant 0 : i32
    return %c0_i32, %c0_i32_0 : i32, i32
  }
  func.func @transform_23(%arg0: i32) -> (i32, i32) {
    %c0_i32 = arith.constant 0 : i32
    %c0_i32_0 = arith.constant 0 : i32
    %c0_i32_1 = arith.constant 0 : i32
    return %c0_i32, %c0_i32_0 : i32, i32
  }
  func.func @transform_24(%arg0: i32) -> (i32, i32) {
    %c0_i32 = arith.constant 0 : i32
    %c0_i32_0 = arith.constant 0 : i32
    %c0_i32_1 = arith.constant 0 : i32
    return %c0_i32, %c0_i32_0 : i32, i32
  }
  func.func @transform_25(%arg0: i32) -> (i32, i32) {
    %c0_i32 = arith.constant 0 : i32
    %c0_i32_0 = arith.constant 0 : i32
    %c0_i32_1 = arith.constant 0 : i32
    return %c0_i32, %c0_i32_0 : i32, i32
  }
  func.func @transform_26(%arg0: i32) -> (i32, i32) {
    %c0_i32 = arith.constant 0 : i32
    %c0_i32_0 = arith.constant 0 : i32
    %c0_i32_1 = arith.constant 0 : i32
    return %c0_i32, %c0_i32_0 : i32, i32
  }
}

</mosaic_0001>

<llo_original>
// kernel: tpu_custom_call.1
$region0: #{tpu_custom_call.1}
  #allocation0 [shape = 'u32[]', space=smem, size = 0x4, offset = 0x4, fixed_abs, tag = 'smem constant byte address 0x4 - core index']
  #allocation1 [shape = 'u32[72,128]{1,0:T(1,128)}', space=vmem, size = 0x9000, scoped, tag = 'internal scratch']
  %s0 = inlined_call_operand.hbm [shape: f32[16,32], index: 0, kind: input, shape index: {}]
  %s1 = inlined_call_operand.vmem [shape: f32[64,32], index: 1, kind: input, shape index: {}]
  %s2 = inlined_call_operand.vmem [shape: f32[32,32], index: 2, kind: input, shape index: {}]
  %s3 = inlined_call_operand.hbm [shape: f32[1,32], index: 3, kind: input, shape index: {}]
  %s4 = inlined_call_operand.vmem [shape: f32[32,32], index: 4, kind: input, shape index: {}]
  %s5 = inlined_call_operand.vmem [shape: f32[1,32], index: 5, kind: input, shape index: {}]
  %s6 = inlined_call_operand.vmem [shape: f32[32,32], index: 6, kind: input, shape index: {}]
  %s7 = inlined_call_operand.vmem [shape: f32[1,32], index: 7, kind: input, shape index: {}]
  %s8 = inlined_call_operand.vmem [shape: f32[64,32], index: 8, kind: input, shape index: {}]
  %s9 = inlined_call_operand.hbm [shape: f32[16,64], index: 9, kind: input, shape index: {}]
  %s10 = inlined_call_operand.vmem [shape: f32[64,64], index: 10, kind: input, shape index: {}]
  %s11 = inlined_call_operand.vmem [shape: f32[32,32], index: 11, kind: input, shape index: {}]
  %s12 = inlined_call_operand.vmem [shape: f32[1,32], index: 12, kind: input, shape index: {}]
  %s13 = inlined_call_operand.hbm [shape: f32[1,32], index: 13, kind: input, shape index: {}]
  %s14 = inlined_call_operand.hbm [shape: f32[1,32], index: 14, kind: input, shape index: {}]
  %s15 = inlined_call_operand.vmem [shape: f32[32,64], index: 15, kind: input, shape index: {}]
  %s16 = inlined_call_operand.hbm [shape: f32[1,64], index: 16, kind: input, shape index: {}]
  %s17 = inlined_call_operand.vmem [shape: f32[64,32], index: 17, kind: input, shape index: {}]
  %s18 = inlined_call_operand.hbm [shape: f32[1,32], index: 18, kind: input, shape index: {}]
  %s19 = inlined_call_operand.hbm [shape: f32[1,32], index: 19, kind: input, shape index: {}]
  %s20 = inlined_call_operand.hbm [shape: f32[1,32], index: 20, kind: input, shape index: {}]
  %s21 = inlined_call_operand.hbm [shape: f32[32,32], index: 21, kind: input, shape index: {}]
  %s22 = inlined_call_operand.hbm [shape: f32[1,32], index: 22, kind: input, shape index: {}]
  %s23 = inlined_call_operand.vmem [shape: f32[16,32], index: 23, kind: input, shape index: {}]
  %s24 = inlined_call_operand.hbm [shape: f32[32,32], index: 24, kind: input, shape index: {}]
  %s25 = inlined_call_operand.hbm [shape: f32[16,32], index: 25, kind: input, shape index: {}]
  %s26 = inlined_call_operand.hbm [shape: f32[16,32], index: 26, kind: output, shape index: {}]
  %s27 = sld [smem:[#allocation0]]
  $region166: #{tpu_custom_call.1} parent=0
    _
  %s29 = ssub.s32 1, %s27
  %s30 = scalar_select 0, %s29, %s27
  $region1: #{tpu_custom_call.1} parent=0
    #allocation2 [shape = 'u8[8192]{0}', space=vmem, size = 0x2000, scoped, tag = 'input window, operand 0, single buffered']
    #allocation3 [shape = 's32[1]{0}', space=sflag, size = 0x4, scoped, tag = 'scoped memory for tpu_custom_call.1']
    #allocation4 [shape = 's32[1]{0}', space=sflag, size = 0x4, scoped, tag = 'scoped memory for tpu_custom_call.1']
    #allocation5 [shape = 'u8[512]{0}', space=vmem, size = 0x400, scoped, tag = 'input window, operand 3, single buffered']
    #allocation6 [shape = 's32[1]{0}', space=sflag, size = 0x4, scoped, tag = 'scoped memory for tpu_custom_call.1']
    #allocation7 [shape = 'u8[8192]{0}', space=vmem, size = 0x2000, scoped, tag = 'input window, operand 9, single buffered']
    #allocation8 [shape = 'u8[512]{0}', space=vmem, size = 0x400, scoped, tag = 'input window, operand 13, single buffered']
    #allocation9 [shape = 's32[1]{0}', space=sflag, size = 0x4, scoped, tag = 'scoped memory for tpu_custom_call.1']
    #allocation10 [shape = 'u8[512]{0}', space=vmem, size = 0x400, scoped, tag = 'input window, operand 14, single buffered']
    #allocation11 [shape = 'u8[512]{0}', space=vmem, size = 0x400, scoped, tag = 'input window, operand 16, single buffered']
    #allocation12 [shape = 's32[1]{0}', space=sflag, size = 0x4, scoped, tag = 'scoped memory for tpu_custom_call.1']
    #allocation13 [shape = 'u8[512]{0}', space=vmem, size = 0x400, scoped, tag = 'input window, operand 18, single buffered']
    #allocation14 [shape = 'u8[512]{0}', space=vmem, size = 0x400, scoped, tag = 'input window, operand 19, single buffered']
    #allocation15 [shape = 's32[1]{0}', space=sflag, size = 0x4, scoped, tag = 'scoped memory for tpu_custom_call.1']
    #allocation16 [shape = 'u8[512]{0}', space=vmem, size = 0x400, scoped, tag = 'input window, operand 20, single buffered']
    #allocation17 [shape = 'u8[16384]{0}', space=vmem, size = 0x4000, scoped, tag = 'input window, operand 21, single buffered']
    #allocation18 [shape = 's32[1]{0}', space=sflag, size = 0x4, scoped, tag = 'scoped memory for tpu_custom_call.1']
    #allocation19 [shape = 'u8[512]{0}', space=vmem, size = 0x400, scoped, tag = 'input window, operand 22, single buffered']
    #allocation20 [shape = 'u8[16384]{0}', space=vmem, size = 0x4000, scoped, tag = 'input window, operand 24, single buffered']
    #allocation21 [shape = 's32[1]{0}', space=sflag, size = 0x4, scoped, tag = 'scoped memory for tpu_custom_call.1']
    #allocation22 [shape = 'u8[8192]{0}', space=vmem, size = 0x2000, scoped, tag = 'input window, operand 25, single buffered']
    #allocation23 [shape = 'u8[8192]{0}', space=vmem, size = 0x2000, scoped, tag = 'output window, operand 0, single buffered']
    %31 = vsyncpa [#allocation3], 0
    %32 = vsyncpa [#allocation6], 0
    %33 = vsyncpa [#allocation9], 0
    %34 = vsyncpa [#allocation12], 0
    %35 = vsyncpa [#allocation15], 0
    %36 = vsyncpa [#allocation18], 0
    %37 = vsyncpa [#allocation21], 0
    %38 = vsyncpa [#allocation4], 0
    // Predicated region
    $region2: #{tpu_custom_call.1} parent=1 // pred_check
      _
    $region3: #{tpu_custom_call.1} parent=1 // pred_check_branch
      %40 = sbr.rel (0) target = $region5
    $region4: #{tpu_custom_call.1} parent=1 // pred_region
      %42 = vsyncadd [#allocation3], 0
      %s43 = sshll.u32 %s0, 4
      %s44 = int_to_ptr.hbm [resolvable:$true] %s43
      %s45 = sshll.u32 [#allocation2], 4
      %s46 = int_to_ptr.vmem [resolvable:$true] %s45
      %51 = dma.hbm_to_vmem [thread:$0]  %s44, 256, %s46, [#allocation3], 128, 128, 8
    $region5: #{tpu_custom_call.1} parent=1 // pred_fallthru
      _
    // Predicated region
    $region6: #{tpu_custom_call.1} parent=1 // pred_check
      _
    $region7: #{tpu_custom_call.1} parent=1 // pred_check_branch
      %53 = sbr.rel (0) target = $region9
    $region8: #{tpu_custom_call.1} parent=1 // pred_region
      _
    $region9: #{tpu_custom_call.1} parent=1 // pred_fallthru
      _
    // Predicated region
    $region10: #{tpu_custom_call.1} parent=1 // pred_check
      _
    $region11: #{tpu_custom_call.1} parent=1 // pred_check_branch
      %55 = sbr.rel (0) target = $region13
    $region12: #{tpu_custom_call.1} parent=1 // pred_region
      _
    $region13: #{tpu_custom_call.1} parent=1 // pred_fallthru
      _
    // Predicated region
    $region14: #{tpu_custom_call.1} parent=1 // pred_check
      _
    $region15: #{tpu_custom_call.1} parent=1 // pred_check_branch
      %57 = sbr.rel (0) target = $region17
    $region16: #{tpu_custom_call.1} parent=1 // pred_region
      %59 = vsyncadd [#allocation6], 0
      %s61 = sshll.u32 %s3, 4
      %s62 = int_to_ptr.hbm [resolvable:$true] %s61
      %s63 = sshll.u32 [#allocation5], 4
      %s64 = int_to_ptr.vmem [resolvable:$true] %s63
      %66 = dma.hbm_to_vmem [thread:$0]  %s62, 16, %s64, [#allocation6]
    $region17: #{tpu_custom_call.1} parent=1 // pred_fallthru
      _
    // Predicated region
    $region18: #{tpu_custom_call.1} parent=1 // pred_check
      _
    $region19: #{tpu_custom_call.1} parent=1 // pred_check_branch
      %68 = sbr.rel (0) target = $region21
    $region20: #{tpu_custom_call.1} parent=1 // pred_region
      _
    $region21: #{tpu_custom_call.1} parent=1 // pred_fallthru
      _
    // Predicated region
    $region22: #{tpu_custom_call.1} parent=1 // pred_check
      _
    $region23: #{tpu_custom_call.1} parent=1 // pred_check_branch
      %70 = sbr.rel (0) target = $region25
    $region24: #{tpu_custom_call.1} parent=1 // pred_region
      _
    $region25: #{tpu_custom_call.1} parent=1 // pred_fallthru
      _
    // Predicated region
    $region26: #{tpu_custom_call.1} parent=1 // pred_check
      _
    $region27: #{tpu_custom_call.1} parent=1 // pred_check_branch
      %72 = sbr.rel (0) target = $region29
    $region28: #{tpu_custom_call.1} parent=1 // pred_region
      _
    $region29: #{tpu_custom_call.1} parent=1 // pred_fallthru
      _
    // Predicated region
    $region30: #{tpu_custom_call.1} parent=1 // pred_check
      _
    $region31: #{tpu_custom_call.1} parent=1 // pred_check_branch
      %74 = sbr.rel (0) target = $region33
    $region32: #{tpu_custom_call.1} parent=1 // pred_region
      _
    $region33: #{tpu_custom_call.1} parent=1 // pred_fallthru
      _
    // Predicated region
    $region34: #{tpu_custom_call.1} parent=1 // pred_check
      _
    $region35: #{tpu_custom_call.1} parent=1 // pred_check_branch
      %76 = sbr.rel (0) target = $region37
    $region36: #{tpu_custom_call.1} parent=1 // pred_region
      _
    $region37: #{tpu_custom_call.1} parent=1 // pred_fallthru
      _
    // Predicated region
    $region38: #{tpu_custom_call.1} parent=1 // pred_check
      _
    $region39: #{tpu_custom_call.1} parent=1 // pred_check_branch
      %78 = sbr.rel (0) target = $region41
    $region40: #{tpu_custom_call.1} parent=1 // pred_region
      %80 = vsyncadd [#allocation6], 0
      %s81 = sshll.u32 %s9, 4
      %s82 = int_to_ptr.hbm [resolvable:$true] %s81
      %s83 = sshll.u32 [#allocation7], 4
      %s84 = int_to_ptr.vmem [resolvable:$true] %s83
      %89 = dma.hbm_to_vmem [thread:$0]  %s82, 256, %s84, [#allocation6], 128, 128, 8
    $region41: #{tpu_custom_call.1} parent=1 // pred_fallthru
      _
    // Predicated region
    $region42: #{tpu_custom_call.1} parent=1 // pred_check
      _
    $region43: #{tpu_custom_call.1} parent=1 // pred_check_branch
      %91 = sbr.rel (0) target = $region45
    $region44: #{tpu_custom_call.1} parent=1 // pred_region
      _
    $region45: #{tpu_custom_call.1} parent=1 // pred_fallthru
      _
    // Predicated region
    $region46: #{tpu_custom_call.1} parent=1 // pred_check
      _
    $region47: #{tpu_custom_call.1} parent=1 // pred_check_branch
      %93 = sbr.rel (0) target = $region49
    $region48: #{tpu_custom_call.1} parent=1 // pred_region
      _
    $region49: #{tpu_custom_call.1} parent=1 // pred_fallthru
      _
    // Predicated region
    $region50: #{tpu_custom_call.1} parent=1 // pred_check
      _
    $region51: #{tpu_custom_call.1} parent=1 // pred_check_branch
      %95 = sbr.rel (0) target = $region53
    $region52: #{tpu_custom_call.1} parent=1 // pred_region
      _
    $region53: #{tpu_custom_call.1} parent=1 // pred_fallthru
      _
    // Predicated region
    $region54: #{tpu_custom_call.1} parent=1 // pred_check
      _
    $region55: #{tpu_custom_call.1} parent=1 // pred_check_branch
      %97 = sbr.rel (0) target = $region57
    $region56: #{tpu_custom_call.1} parent=1 // pred_region
      %99 = vsyncadd [#allocation9], 0
      %s101 = sshll.u32 %s13, 4
      %s102 = int_to_ptr.hbm [resolvable:$true] %s101
      %s103 = sshll.u32 [#allocation8], 4
      %s104 = int_to_ptr.vmem [resolvable:$true] %s103
      %106 = dma.hbm_to_vmem [thread:$0]  %s102, 16, %s104, [#allocation9]
    $region57: #{tpu_custom_call.1} parent=1 // pred_fallthru
      _
    // Predicated region
    $region58: #{tpu_custom_call.1} parent=1 // pred_check
      _
    $region59: #{tpu_custom_call.1} parent=1 // pred_check_branch
      %108 = sbr.rel (0) target = $region61
    $region60: #{tpu_custom_call.1} parent=1 // pred_region
      %110 = vsyncadd [#allocation9], 0
      %s112 = sshll.u32 %s14, 4
      %s113 = int_to_ptr.hbm [resolvable:$true] %s112
      %s114 = sshll.u32 [#allocation10], 4
      %s115 = int_to_ptr.vmem [resolvable:$true] %s114
      %117 = dma.hbm_to_vmem [thread:$0]  %s113, 16, %s115, [#allocation9]
    $region61: #{tpu_custom_call.1} parent=1 // pred_fallthru
      _
    // Predicated region
    $region62: #{tpu_custom_call.1} parent=1 // pred_check
      _
    $region63: #{tpu_custom_call.1} parent=1 // pred_check_branch
      %119 = sbr.rel (0) target = $region65
    $region64: #{tpu_custom_call.1} parent=1 // pred_region
      _
    $region65: #{tpu_custom_call.1} parent=1 // pred_fallthru
      _
    // Predicated region
    $region66: #{tpu_custom_call.1} parent=1 // pred_check
      _
    $region67: #{tpu_custom_call.1} parent=1 // pred_check_branch
      %121 = sbr.rel (0) target = $region69
    $region68: #{tpu_custom_call.1} parent=1 // pred_region
      %123 = vsyncadd [#allocation12], 0
      %s125 = sshll.u32 %s16, 4
      %s126 = int_to_ptr.hbm [resolvable:$true] %s125
      %s127 = sshll.u32 [#allocation11], 4
      %s128 = int_to_ptr.vmem [resolvable:$true] %s127
      %130 = dma.hbm_to_vmem [thread:$0]  %s126, 16, %s128, [#allocation12]
    $region69: #{tpu_custom_call.1} parent=1 // pred_fallthru
      _
    // Predicated region
    $region70: #{tpu_custom_call.1} parent=1 // pred_check
      _
    $region71: #{tpu_custom_call.1} parent=1 // pred_check_branch
      %132 = sbr.rel (0) target = $region73
    $region72: #{tpu_custom_call.1} parent=1 // pred_region
      _
    $region73: #{tpu_custom_call.1} parent=1 // pred_fallthru
      _
    // Predicated region
    $region74: #{tpu_custom_call.1} parent=1 // pred_check
      _
    $region75: #{tpu_custom_call.1} parent=1 // pred_check_branch
      %134 = sbr.rel (0) target = $region77
    $region76: #{tpu_custom_call.1} parent=1 // pred_region
      %136 = vsyncadd [#allocation12], 0
      %s138 = sshll.u32 %s18, 4
      %s139 = int_to_ptr.hbm [resolvable:$true] %s138
      %s140 = sshll.u32 [#allocation13], 4
      %s141 = int_to_ptr.vmem [resolvable:$true] %s140
      %143 = dma.hbm_to_vmem [thread:$0]  %s139, 16, %s141, [#allocation12]
    $region77: #{tpu_custom_call.1} parent=1 // pred_fallthru
      _
    // Predicated region
    $region78: #{tpu_custom_call.1} parent=1 // pred_check
      _
    $region79: #{tpu_custom_call.1} parent=1 // pred_check_branch
      %145 = sbr.rel (0) target = $region81
    $region80: #{tpu_custom_call.1} parent=1 // pred_region
      %147 = vsyncadd [#allocation15], 0
      %s149 = sshll.u32 %s19, 4
      %s150 = int_to_ptr.hbm [resolvable:$true] %s149
      %s151 = sshll.u32 [#allocation14], 4
      %s152 = int_to_ptr.vmem [resolvable:$true] %s151
      %154 = dma.hbm_to_vmem [thread:$0]  %s150, 16, %s152, [#allocation15]
    $region81: #{tpu_custom_call.1} parent=1 // pred_fallthru
      _
    // Predicated region
    $region82: #{tpu_custom_call.1} parent=1 // pred_check
      _
    $region83: #{tpu_custom_call.1} parent=1 // pred_check_branch
      %156 = sbr.rel (0) target = $region85
    $region84: #{tpu_custom_call.1} parent=1 // pred_region
      %158 = vsyncadd [#allocation15], 0
      %s160 = sshll.u32 %s20, 4
      %s161 = int_to_ptr.hbm [resolvable:$true] %s160
      %s162 = sshll.u32 [#allocation16], 4
      %s163 = int_to_ptr.vmem [resolvable:$true] %s162
      %165 = dma.hbm_to_vmem [thread:$0]  %s161, 16, %s163, [#allocation15]
    $region85: #{tpu_custom_call.1} parent=1 // pred_fallthru
      _
    // Predicated region
    $region86: #{tpu_custom_call.1} parent=1 // pred_check
      _
    $region87: #{tpu_custom_call.1} parent=1 // pred_check_branch
      %167 = sbr.rel (0) target = $region89
    $region88: #{tpu_custom_call.1} parent=1 // pred_region
      %169 = vsyncadd [#allocation18], 0
      %s170 = sshll.u32 %s21, 4
      %s171 = int_to_ptr.hbm [resolvable:$true] %s170
      %s172 = sshll.u32 [#allocation17], 4
      %s173 = int_to_ptr.vmem [resolvable:$true] %s172
      %178 = dma.hbm_to_vmem [thread:$0]  %s171, 512, %s173, [#allocation18], 128, 128, 8
    $region89: #{tpu_custom_call.1} parent=1 // pred_fallthru
      _
    // Predicated region
    $region90: #{tpu_custom_call.1} parent=1 // pred_check
      _
    $region91: #{tpu_custom_call.1} parent=1 // pred_check_branch
      %180 = sbr.rel (0) target = $region93
    $region92: #{tpu_custom_call.1} parent=1 // pred_region
      %182 = vsyncadd [#allocation18], 0
      %s184 = sshll.u32 %s22, 4
      %s185 = int_to_ptr.hbm [resolvable:$true] %s184
      %s186 = sshll.u32 [#allocation19], 4
      %s187 = int_to_ptr.vmem [resolvable:$true] %s186
      %189 = dma.hbm_to_vmem [thread:$0]  %s185, 16, %s187, [#allocation18]
    $region93: #{tpu_custom_call.1} parent=1 // pred_fallthru
      _
    // Predicated region
    $region94: #{tpu_custom_call.1} parent=1 // pred_check
      _
    $region95: #{tpu_custom_call.1} parent=1 // pred_check_branch
      %191 = sbr.rel (0) target = $region97
    $region96: #{tpu_custom_call.1} parent=1 // pred_region
      _
    $region97: #{tpu_custom_call.1} parent=1 // pred_fallthru
      _
    // Predicated region
    $region98: #{tpu_custom_call.1} parent=1 // pred_check
      _
    $region99: #{tpu_custom_call.1} parent=1 // pred_check_branch
      %193 = sbr.rel (0) target = $region101
    $region100: #{tpu_custom_call.1} parent=1 // pred_region
      %195 = vsyncadd [#allocation21], 0
      %s196 = sshll.u32 %s24, 4
      %s197 = int_to_ptr.hbm [resolvable:$true] %s196
      %s198 = sshll.u32 [#allocation20], 4
      %s199 = int_to_ptr.vmem [resolvable:$true] %s198
      %204 = dma.hbm_to_vmem [thread:$0]  %s197, 512, %s199, [#allocation21], 128, 128, 8
    $region101: #{tpu_custom_call.1} parent=1 // pred_fallthru
      _
    // Predicated region
    $region102: #{tpu_custom_call.1} parent=1 // pred_check
      _
    $region103: #{tpu_custom_call.1} parent=1 // pred_check_branch
      %206 = sbr.rel (0) target = $region105
    $region104: #{tpu_custom_call.1} parent=1 // pred_region
      %208 = vsyncadd [#allocation21], 0
      %s209 = sshll.u32 %s25, 4
      %s210 = int_to_ptr.hbm [resolvable:$true] %s209
      %s211 = sshll.u32 [#allocation22], 4
      %s212 = int_to_ptr.vmem [resolvable:$true] %s211
      %217 = dma.hbm_to_vmem [thread:$0]  %s210, 256, %s212, [#allocation21], 128, 128, 8
    $region105: #{tpu_custom_call.1} parent=1 // pred_fallthru
      _
    // Predicated region
    $region106: #{tpu_custom_call.1} parent=1 // pred_check
      _
    $region107: #{tpu_custom_call.1} parent=1 // pred_check_branch
      %219 = sbr.rel (0) target = $region109
    $region108: #{tpu_custom_call.1} parent=1 // pred_region
      %221 = dma.done [#allocation3], 256
    $region109: #{tpu_custom_call.1} parent=1 // pred_fallthru
      _
    // Predicated region
    $region110: #{tpu_custom_call.1} parent=1 // pred_check
      _
    $region111: #{tpu_custom_call.1} parent=1 // pred_check_branch
      %223 = sbr.rel (0) target = $region113
    $region112: #{tpu_custom_call.1} parent=1 // pred_region
      %225 = dma.done [#allocation6], 16
    $region113: #{tpu_custom_call.1} parent=1 // pred_fallthru
      _
    // Predicated region
    $region114: #{tpu_custom_call.1} parent=1 // pred_check
      _
    $region115: #{tpu_custom_call.1} parent=1 // pred_check_branch
      %227 = sbr.rel (0) target = $region117
    $region116: #{tpu_custom_call.1} parent=1 // pred_region
      %229 = dma.done [#allocation6], 256
    $region117: #{tpu_custom_call.1} parent=1 // pred_fallthru
      _
    // Predicated region
    $region118: #{tpu_custom_call.1} parent=1 // pred_check
      _
    $region119: #{tpu_custom_call.1} parent=1 // pred_check_branch
      %231 = sbr.rel (0) target = $region121
    $region120: #{tpu_custom_call.1} parent=1 // pred_region
      %233 = dma.done [#allocation9], 16
    $region121: #{tpu_custom_call.1} parent=1 // pred_fallthru
      _
    // Predicated region
    $region122: #{tpu_custom_call.1} parent=1 // pred_check
      _
    $region123: #{tpu_custom_call.1} parent=1 // pred_check_branch
      %235 = sbr.rel (0) target = $region125
    $region124: #{tpu_custom_call.1} parent=1 // pred_region
      %237 = dma.done [#allocation9], 16
    $region125: #{tpu_custom_call.1} parent=1 // pred_fallthru
      _
    // Predicated region
    $region126: #{tpu_custom_call.1} parent=1 // pred_check
      _
    $region127: #{tpu_custom_call.1} parent=1 // pred_check_branch
      %239 = sbr.rel (0) target = $region129
    $region128: #{tpu_custom_call.1} parent=1 // pred_region
      %241 = dma.done [#allocation12], 16
    $region129: #{tpu_custom_call.1} parent=1 // pred_fallthru
      _
    // Predicated region
    $region130: #{tpu_custom_call.1} parent=1 // pred_check
      _
    $region131: #{tpu_custom_call.1} parent=1 // pred_check_branch
      %243 = sbr.rel (0) target = $region133
    $region132: #{tpu_custom_call.1} parent=1 // pred_region
      %245 = dma.done [#allocation12], 16
    $region133: #{tpu_custom_call.1} parent=1 // pred_fallthru
      _
    // Predicated region
    $region134: #{tpu_custom_call.1} parent=1 // pred_check
      _
    $region135: #{tpu_custom_call.1} parent=1 // pred_check_branch
      %247 = sbr.rel (0) target = $region137
    $region136: #{tpu_custom_call.1} parent=1 // pred_region
      %249 = dma.done [#allocation15], 16
    $region137: #{tpu_custom_call.1} parent=1 // pred_fallthru
      _
    // Predicated region
    $region138: #{tpu_custom_call.1} parent=1 // pred_check
      _
    $region139: #{tpu_custom_call.1} parent=1 // pred_check_branch
      %251 = sbr.rel (0) target = $region141
    $region140: #{tpu_custom_call.1} parent=1 // pred_region
      %253 = dma.done [#allocation15], 16
    $region141: #{tpu_custom_call.1} parent=1 // pred_fallthru
      _
    // Predicated region
    $region142: #{tpu_custom_call.1} parent=1 // pred_check
      _
    $region143: #{tpu_custom_call.1} parent=1 // pred_check_branch
      %255 = sbr.rel (0) target = $region145
    $region144: #{tpu_custom_call.1} parent=1 // pred_region
      %257 = dma.done [#allocation18], 512
    $region145: #{tpu_custom_call.1} parent=1 // pred_fallthru
      _
    // Predicated region
    $region146: #{tpu_custom_call.1} parent=1 // pred_check
      _
    $region147: #{tpu_custom_call.1} parent=1 // pred_check_branch
      %259 = sbr.rel (0) target = $region149
    $region148: #{tpu_custom_call.1} parent=1 // pred_region
      %261 = dma.done [#allocation18], 16
    $region149: #{tpu_custom_call.1} parent=1 // pred_fallthru
      _
    // Predicated region
    $region150: #{tpu_custom_call.1} parent=1 // pred_check
      _
    $region151: #{tpu_custom_call.1} parent=1 // pred_check_branch
      %263 = sbr.rel (0) target = $region153
    $region152: #{tpu_custom_call.1} parent=1 // pred_region
      %265 = dma.done [#allocation21], 512
    $region153: #{tpu_custom_call.1} parent=1 // pred_fallthru
      _
    // Predicated region
    $region154: #{tpu_custom_call.1} parent=1 // pred_check
      _
    $region155: #{tpu_custom_call.1} parent=1 // pred_check_branch
      %267 = sbr.rel (0) target = $region157
    $region156: #{tpu_custom_call.1} parent=1 // pred_region
      %269 = dma.done [#allocation21], 256
    $region157: #{tpu_custom_call.1} parent=1 // pred_fallthru
      _
    %v270 = vld [vmem:[#allocation2] sm:$0xff]
    %v271 = vld [vmem:[#allocation2 + $0x8] sm:$0xff]
    %v272 = vld [vmem:[%s2] sm:$0xff]
    %v273 = vld [vmem:[%s2 + $0x8] sm:$0xff]
    %v274 = vld [vmem:[%s2 + $0x10] sm:$0xff]
    %v275 = vld [vmem:[%s2 + $0x18] sm:$0xff]
    %v276 = vld [vmem:[#allocation5] sm:$0x1]
    %v278 = vperm.slane %v276, 0
    %vm280 = vcmask 261120
    %v282 = vsel %vm280, %v270, 0
    %v285 = vsel %vm280, %v271, 0
    %287 = vmatpush.msra.mxu0 0.0
    %288 = vmatpush.msra.mxu0 0.0
    %289 = vmatpush.msra.mxu0 0.0
    %290 = vmatpush.msra.mxu0 0.0
    %291 = vmatpush.msra.mxu0 0.0
    %292 = vmatpush.msra.mxu0 0.0
    %293 = vmatpush.msra.mxu0 0.0
    %294 = vmatpush.msra.mxu0 0.0
    %295 = vmatpush.msra.mxu0 0.0
    %296 = vmatpush.msra.mxu0 0.0
    %297 = vmatpush.msra.mxu0 0.0
    %298 = vmatpush.msra.mxu0 0.0
    %299 = vmatpush.msra.mxu0 %v275
    %300 = vmatpush.msra.mxu0 %v274
    %301 = vmatpush.msra.mxu0 %v273
    %302 = vmatpush.msra.mxu0 %v272
    %303 = vmatmul.f32.gmra.mxu0 %v282
    %v304 = vpop.f32.mrf.mxu0
    %v305 = vadd.f32 %v278, %v304
    %306 = vmatmul.f32.gmra.mxu0 %v285
    %v307 = vpop.f32.mrf.mxu0
    %v308 = vadd.f32 %v278, %v307
    %309 = vdwg.mxu0
    %v310 = vld [vmem:[%s8] sm:$0xff]
    %v311 = vld [vmem:[%s8 + $0x8] sm:$0xff]
    %v312 = vld [vmem:[%s8 + $0x10] sm:$0xff]
    %v313 = vld [vmem:[%s8 + $0x18] sm:$0xff]
    %v314 = vld [vmem:[%s8 + $0x20] sm:$0xff]
    %v315 = vld [vmem:[%s8 + $0x28] sm:$0xff]
    %v316 = vld [vmem:[%s8 + $0x30] sm:$0xff]
    %v317 = vld [vmem:[%s8 + $0x38] sm:$0xff]
    %v318 = vld [vmem:[%s1] sm:$0xff]
    %v319 = vld [vmem:[%s1 + $0x8] sm:$0xff]
    %v320 = vld [vmem:[%s1 + $0x10] sm:$0xff]
    %v321 = vld [vmem:[%s1 + $0x18] sm:$0xff]
    %v322 = vld [vmem:[%s1 + $0x20] sm:$0xff]
    %v323 = vld [vmem:[%s1 + $0x28] sm:$0xff]
    %v324 = vld [vmem:[%s1 + $0x30] sm:$0xff]
    %v325 = vld [vmem:[%s1 + $0x38] sm:$0xff]
    %v326 = vld [vmem:[%s4] sm:$0xff]
    %v327 = vld [vmem:[%s4 + $0x8] sm:$0xff]
    %v328 = vld [vmem:[%s4 + $0x10] sm:$0xff]
    %v329 = vld [vmem:[%s4 + $0x18] sm:$0xff]
    %v330 = vld [vmem:[%s5] sm:$0x1]
    %v332 = vperm.slane %v330, 0
    %v335 = vsel %vm280, %v318, 0
    %v338 = vsel %vm280, %v319, 0
    %v341 = vsel %vm280, %v320, 0
    %v344 = vsel %vm280, %v321, 0
    %v347 = vsel %vm280, %v322, 0
    %v350 = vsel %vm280, %v323, 0
    %v353 = vsel %vm280, %v324, 0
    %v356 = vsel %vm280, %v325, 0
    %358 = vmatpush.msra.mxu0 0.0
    %359 = vmatpush.msra.mxu0 0.0
    %360 = vmatpush.msra.mxu0 0.0
    %361 = vmatpush.msra.mxu0 0.0
    %362 = vmatpush.msra.mxu0 0.0
    %363 = vmatpush.msra.mxu0 0.0
    %364 = vmatpush.msra.mxu0 0.0
    %365 = vmatpush.msra.mxu0 0.0
    %366 = vmatpush.msra.mxu0 0.0
    %367 = vmatpush.msra.mxu0 0.0
    %368 = vmatpush.msra.mxu0 0.0
    %369 = vmatpush.msra.mxu0 0.0
    %370 = vmatpush.msra.mxu0 %v329
    %371 = vmatpush.msra.mxu0 %v328
    %372 = vmatpush.msra.mxu0 %v327
    %373 = vmatpush.msra.mxu0 %v326
    %374 = vmatmul.f32.gmra.mxu0 %v335
    %v375 = vpop.f32.mrf.mxu0
    %v376 = vadd.f32 %v332, %v375
    %377 = vmatmul.f32.gmra.mxu0 %v338
    %v378 = vpop.f32.mrf.mxu0
    %v379 = vadd.f32 %v332, %v378
    %380 = vmatmul.f32.gmra.mxu0 %v341
    %v381 = vpop.f32.mrf.mxu0
    %v382 = vadd.f32 %v332, %v381
    %383 = vmatmul.f32.gmra.mxu0 %v344
    %v384 = vpop.f32.mrf.mxu0
    %v385 = vadd.f32 %v332, %v384
    %386 = vmatmul.f32.gmra.mxu0 %v347
    %v387 = vpop.f32.mrf.mxu0
    %v388 = vadd.f32 %v332, %v387
    %389 = vmatmul.f32.gmra.mxu0 %v350
    %v390 = vpop.f32.mrf.mxu0
    %v391 = vadd.f32 %v332, %v390
    %392 = vmatmul.f32.gmra.mxu0 %v353
    %v393 = vpop.f32.mrf.mxu0
    %v394 = vadd.f32 %v332, %v393
    %395 = vmatmul.f32.gmra.mxu0 %v356
    %v396 = vpop.f32.mrf.mxu0
    %v397 = vadd.f32 %v332, %v396
    %398 = vdwg.mxu0
    %v399 = vmul.f32 %v376, %v310
    %v400 = vmul.f32 %v379, %v311
    %v401 = vmul.f32 %v382, %v312
    %v402 = vmul.f32 %v385, %v313
    %v403 = vmul.f32 %v388, %v314
    %v404 = vmul.f32 %v391, %v315
    %v405 = vmul.f32 %v394, %v316
    %v406 = vmul.f32 %v397, %v317
    %v407 = vld [vmem:[%s6] sm:$0xff]
    %v408 = vld [vmem:[%s6 + $0x8] sm:$0xff]
    %v409 = vld [vmem:[%s6 + $0x10] sm:$0xff]
    %v410 = vld [vmem:[%s6 + $0x18] sm:$0xff]
    %v411 = vld [vmem:[%s7] sm:$0x1]
    %v413 = vperm.slane %v411, 0
    %415 = vmatpush.msra.mxu0 0.0
    %416 = vmatpush.msra.mxu0 0.0
    %417 = vmatpush.msra.mxu0 0.0
    %418 = vmatpush.msra.mxu0 0.0
    %419 = vmatpush.msra.mxu0 0.0
    %420 = vmatpush.msra.mxu0 0.0
    %421 = vmatpush.msra.mxu0 0.0
    %422 = vmatpush.msra.mxu0 0.0
    %423 = vmatpush.msra.mxu0 0.0
    %424 = vmatpush.msra.mxu0 0.0
    %425 = vmatpush.msra.mxu0 0.0
    %426 = vmatpush.msra.mxu0 0.0
    %427 = vmatpush.msra.mxu0 %v410
    %428 = vmatpush.msra.mxu0 %v409
    %429 = vmatpush.msra.mxu0 %v408
    %430 = vmatpush.msra.mxu0 %v407
    %431 = vmatmul.f32.gmra.mxu0 %v335
    %v432 = vpop.f32.mrf.mxu0
    %v433 = vadd.f32 %v413, %v432
    %434 = vmatmul.f32.gmra.mxu0 %v338
    %v435 = vpop.f32.mrf.mxu0
    %v436 = vadd.f32 %v413, %v435
    %437 = vmatmul.f32.gmra.mxu0 %v341
    %v438 = vpop.f32.mrf.mxu0
    %v439 = vadd.f32 %v413, %v438
    %440 = vmatmul.f32.gmra.mxu0 %v344
    %v441 = vpop.f32.mrf.mxu0
    %v442 = vadd.f32 %v413, %v441
    %443 = vmatmul.f32.gmra.mxu0 %v347
    %v444 = vpop.f32.mrf.mxu0
    %v445 = vadd.f32 %v413, %v444
    %446 = vmatmul.f32.gmra.mxu0 %v350
    %v447 = vpop.f32.mrf.mxu0
    %v448 = vadd.f32 %v413, %v447
    %449 = vmatmul.f32.gmra.mxu0 %v353
    %v450 = vpop.f32.mrf.mxu0
    %v451 = vadd.f32 %v413, %v450
    %452 = vmatmul.f32.gmra.mxu0 %v356
    %v453 = vpop.f32.mrf.mxu0
    %v454 = vadd.f32 %v413, %v453
    %455 = vdwg.mxu0
    %v456 = vmul.f32 %v433, %v310
    %v457 = vmul.f32 %v436, %v311
    %v458 = vmul.f32 %v439, %v312
    %v459 = vmul.f32 %v442, %v313
    %v460 = vmul.f32 %v445, %v314
    %v461 = vmul.f32 %v448, %v315
    %v462 = vmul.f32 %v451, %v316
    %v463 = vmul.f32 %v454, %v317
    %v464 = vld [vmem:[#allocation7] sm:$0xff]
    %v465 = vld [vmem:[#allocation7 + $0x8] sm:$0xff]
    %v467 = vsel %vm280, %v305, 0
    %v470 = vsel %vm280, %v308, 0
    %v473 = vsel %vm280, %v399, 0
    %v476 = vsel %vm280, %v400, 0
    %v479 = vsel %vm280, %v401, 0
    %v482 = vsel %vm280, %v402, 0
    %v485 = vsel %vm280, %v403, 0
    %v488 = vsel %vm280, %v404, 0
    %v491 = vsel %vm280, %v405, 0
    %v494 = vsel %vm280, %v406, 0
    %496 = vmatpush.xpose.msra.mxu0 0.0
    %497 = vmatpush.xpose.msra.mxu0 0.0
    %498 = vmatpush.xpose.msra.mxu0 0.0
    %499 = vmatpush.xpose.msra.mxu0 0.0
    %500 = vmatpush.xpose.msra.mxu0 0.0
    %501 = vmatpush.xpose.msra.mxu0 0.0
    %502 = vmatpush.xpose.msra.mxu0 0.0
    %503 = vmatpush.xpose.msra.mxu0 0.0
    %504 = vmatpush.xpose.msra.mxu0 %v494
    %505 = vmatpush.xpose.msra.mxu0 %v491
    %506 = vmatpush.xpose.msra.mxu0 %v488
    %507 = vmatpush.xpose.msra.mxu0 %v485
    %508 = vmatpush.xpose.msra.mxu0 %v482
    %509 = vmatpush.xpose.msra.mxu0 %v479
    %510 = vmatpush.xpose.msra.mxu0 %v476
    %511 = vmatpush.xpose.msra.mxu0 %v473
    %512 = vmatmul.f32.gmra.mxu0 %v467
    %v513 = vpop.f32.mrf.mxu0
    %v514 = vadd.f32 %v464, %v513
    %515 = vmatmul.f32.gmra.mxu0 %v470
    %v516 = vpop.f32.mrf.mxu0
    %v517 = vadd.f32 %v465, %v516
    %518 = vdwg.mxu0
    %vm519 = vcmask 523264
    %v520 = vsel %vm519, %v514, -inf
    %521 = vmax.xlane.f32.xlu0 %v520
    %v522 = vpop.xlane.xlu0 %521
    %v523 = vsel %vm519, %v517, -inf
    %524 = vmax.xlane.f32.xlu0 %v523
    %v525 = vpop.xlane.xlu0 %524
    %v526 = vsub.f32 %v514, %v522
    %v527 = vsub.f32 %v517, %v525
    %v528 = vmul.f32 %v526, 1.442695
    %v529 = vpow.pop %v528
    %v530 = vmul.f32 %v527, 1.442695
    %v531 = vpow.pop %v530
    %v532 = vld [vmem:[%s10] sm:$0xff]
    %v533 = vld [vmem:[%s10 + $0x8] sm:$0xff]
    %v534 = vld [vmem:[%s10 + $0x10] sm:$0xff]
    %v535 = vld [vmem:[%s10 + $0x18] sm:$0xff]
    %v536 = vld [vmem:[%s10 + $0x20] sm:$0xff]
    %v537 = vld [vmem:[%s10 + $0x28] sm:$0xff]
    %v538 = vld [vmem:[%s10 + $0x30] sm:$0xff]
    %v539 = vld [vmem:[%s10 + $0x38] sm:$0xff]
    %v541 = vsel %vm519, %v529, 0
    %v544 = vsel %vm519, %v531, 0
    %546 = vmatpush.msra.mxu0 0.0
    %547 = vmatpush.msra.mxu0 0.0
    %548 = vmatpush.msra.mxu0 0.0
    %549 = vmatpush.msra.mxu0 0.0
    %550 = vmatpush.msra.mxu0 0.0
    %551 = vmatpush.msra.mxu0 0.0
    %552 = vmatpush.msra.mxu0 0.0
    %553 = vmatpush.msra.mxu0 0.0
    %554 = vmatpush.msra.mxu0 %v539
    %555 = vmatpush.msra.mxu0 %v538
    %556 = vmatpush.msra.mxu0 %v537
    %557 = vmatpush.msra.mxu0 %v536
    %558 = vmatpush.msra.mxu0 %v535
    %559 = vmatpush.msra.mxu0 %v534
    %560 = vmatpush.msra.mxu0 %v533
    %561 = vmatpush.msra.mxu0 %v532
    %562 = vmatmul.f32.gmra.mxu0 %v541
    %v563 = vpop.f32.mrf.mxu0
    %v564 = vadd.f32 0.0, %v563
    %565 = vmatmul.f32.gmra.mxu0 %v544
    %v566 = vpop.f32.mrf.mxu0
    %v567 = vadd.f32 0.0, %v566
    %568 = vdwg.mxu0
    %v569 = vrcp.pop %v564
    %v570 = vmul.f32 %v564, %v569
    %v571 = vsub.f32 1.0, %v570
    %v572 = vmul.f32 %v569, %v571
    %v573 = vadd.f32 %v569, %v572
    %vm574 = vweird.f32 %v564
    %vm575 = vweird.f32 %v569
    %vm576 = vmor %vm574, %vm575
    %v577 = vsel %vm576, %v569, %v573
    %v578 = vand.u32 2147483647, %v564
    %vm579 = vcmp.eq.f32.partialorder %v578, 8.507059e+37
    %v580 = vand.u32 %v564, 2147483648
    %v581 = vor.u32 1.1754944e-38, %v580
    %v582 = vsel %vm579, %v581, %v577
    %v583 = vmul.f32 %v529, %v582
    %v584 = vrcp.pop %v567
    %v585 = vmul.f32 %v567, %v584
    %v586 = vsub.f32 1.0, %v585
    %v587 = vmul.f32 %v584, %v586
    %v588 = vadd.f32 %v584, %v587
    %vm589 = vweird.f32 %v567
    %vm590 = vweird.f32 %v584
    %vm591 = vmor %vm589, %vm590
    %v592 = vsel %vm591, %v584, %v588
    %v593 = vand.u32 2147483647, %v567
    %vm594 = vcmp.eq.f32.partialorder %v593, 8.507059e+37
    %v595 = vand.u32 %v567, 2147483648
    %v596 = vor.u32 1.1754944e-38, %v595
    %v597 = vsel %vm594, %v596, %v592
    %v598 = vmul.f32 %v531, %v597
    %v600 = vsel %vm519, %v583, 0
    %v603 = vsel %vm519, %v598, 0
    %605 = vmatpush.msra.mxu0 0.0
    %606 = vmatpush.msra.mxu0 0.0
    %607 = vmatpush.msra.mxu0 0.0
    %608 = vmatpush.msra.mxu0 0.0
    %609 = vmatpush.msra.mxu0 0.0
    %610 = vmatpush.msra.mxu0 0.0
    %611 = vmatpush.msra.mxu0 0.0
    %612 = vmatpush.msra.mxu0 0.0
    %613 = vmatpush.msra.mxu0 %v463
    %614 = vmatpush.msra.mxu0 %v462
    %615 = vmatpush.msra.mxu0 %v461
    %616 = vmatpush.msra.mxu0 %v460
    %617 = vmatpush.msra.mxu0 %v459
    %618 = vmatpush.msra.mxu0 %v458
    %619 = vmatpush.msra.mxu0 %v457
    %620 = vmatpush.msra.mxu0 %v456
    %621 = vmatmul.f32.gmra.mxu0 %v600
    %v622 = vpop.f32.mrf.mxu0
    %v623 = vadd.f32 0.0, %v622
    %624 = vmatmul.f32.gmra.mxu0 %v603
    %v625 = vpop.f32.mrf.mxu0
    %v626 = vadd.f32 0.0, %v625
    %627 = vdwg.mxu0
    %v628 = vld [vmem:[%s11] sm:$0xff]
    %v629 = vld [vmem:[%s11 + $0x8] sm:$0xff]
    %v630 = vld [vmem:[%s11 + $0x10] sm:$0xff]
    %v631 = vld [vmem:[%s11 + $0x18] sm:$0xff]
    %v632 = vld [vmem:[%s12] sm:$0x1]
    %v634 = vperm.slane %v632, 0
    %v637 = vsel %vm280, %v623, 0
    %v640 = vsel %vm280, %v626, 0
    %642 = vmatpush.msra.mxu0 0.0
    %643 = vmatpush.msra.mxu0 0.0
    %644 = vmatpush.msra.mxu0 0.0
    %645 = vmatpush.msra.mxu0 0.0
    %646 = vmatpush.msra.mxu0 0.0
    %647 = vmatpush.msra.mxu0 0.0
    %648 = vmatpush.msra.mxu0 0.0
    %649 = vmatpush.msra.mxu0 0.0
    %650 = vmatpush.msra.mxu0 0.0
    %651 = vmatpush.msra.mxu0 0.0
    %652 = vmatpush.msra.mxu0 0.0
    %653 = vmatpush.msra.mxu0 0.0
    %654 = vmatpush.msra.mxu0 %v631
    %655 = vmatpush.msra.mxu0 %v630
    %656 = vmatpush.msra.mxu0 %v629
    %657 = vmatpush.msra.mxu0 %v628
    %658 = vmatmul.f32.gmra.mxu0 %v637
    %v659 = vpop.f32.mrf.mxu0
    %v660 = vadd.f32 %v634, %v659
    %661 = vmatmul.f32.gmra.mxu0 %v640
    %v662 = vpop.f32.mrf.mxu0
    %v663 = vadd.f32 %v634, %v662
    %664 = vdwg.mxu0
    %v665 = vadd.f32 %v660, %v270
    %v666 = vadd.f32 %v663, %v271
    %v667 = vld [vmem:[#allocation8] sm:$0x1]
    %v668 = vld [vmem:[#allocation10] sm:$0x1]
    %v669 = vsel %vm280, %v665, 0.0
    %670 = vadd.xlane.f32.xlu0 %v669
    %v671 = vpop.xlane.xlu0 %670
    %v672 = vsel %vm280, %v666, 0.0
    %673 = vadd.xlane.f32.xlu0 %v672
    %v674 = vpop.xlane.xlu0 %673
    %v675 = vrcp.pop 32.0
    %v676 = vmul.f32 32.0, %v675
    %v677 = vsub.f32 1.0, %v676
    %v678 = vmul.f32 %v675, %v677
    %v679 = vadd.f32 %v675, %v678
    %vm680 = vweird.f32 %v675
    %v681 = vsel %vm680, %v675, %v679
    %v682 = vmul.f32 %v671, %v681
    %v683 = vmul.f32 %v674, %v681
    %v684 = vsub.f32 %v665, %v682
    %v685 = vsub.f32 %v666, %v683
    %v686 = vmul.f32 %v684, %v684
    %v687 = vmul.f32 %v685, %v685
    %v688 = vsel %vm280, %v686, 0.0
    %689 = vadd.xlane.f32.xlu0 %v688
    %v690 = vpop.xlane.xlu0 %689
    %v691 = vsel %vm280, %v687, 0.0
    %692 = vadd.xlane.f32.xlu0 %v691
    %v693 = vpop.xlane.xlu0 %692
    %v694 = vmul.f32 %v690, %v681
    %v695 = vmul.f32 %v693, %v681
    %v696 = vadd.f32 %v694, 1e-12
    %v697 = vadd.f32 %v695, 1e-12
    %v698 = vrsqrt.pop %v696
    %v699 = vmul.f32 %v698, %v696
    %v700 = vmul.f32 %v699, %v698
    %v701 = vmul.f32 0.5, %v700
    %v702 = vsub.f32 1.5, %v701
    %v703 = vmul.f32 %v698, %v702
    %vm704 = vweird.f32 %v696
    %vm705 = vweird.f32 %v698
    %vm706 = vmor %vm704, %vm705
    %v707 = vsel %vm706, %v698, %v703
    %v708 = vrsqrt.pop %v697
    %v709 = vmul.f32 %v708, %v697
    %v710 = vmul.f32 %v709, %v708
    %v711 = vmul.f32 0.5, %v710
    %v712 = vsub.f32 1.5, %v711
    %v713 = vmul.f32 %v708, %v712
    %vm714 = vweird.f32 %v697
    %vm715 = vweird.f32 %v708
    %vm716 = vmor %vm714, %vm715
    %v717 = vsel %vm716, %v708, %v713
    %v718 = vmul.f32 %v684, %v707
    %v719 = vmul.f32 %v685, %v717
    %v721 = vperm.slane %v667, 0
    %v723 = vmul.f32 %v718, %v721
    %v724 = vmul.f32 %v719, %v721
    %v726 = vperm.slane %v668, 0
    %v728 = vadd.f32 %v723, %v726
    %v729 = vadd.f32 %v724, %v726
    %v730 = vld [vmem:[%s15] sm:$0xff]
    %v731 = vld [vmem:[%s15 + $0x8] sm:$0xff]
    %v732 = vld [vmem:[%s15 + $0x10] sm:$0xff]
    %v733 = vld [vmem:[%s15 + $0x18] sm:$0xff]
    %v734 = vld [vmem:[#allocation11] sm:$0x1]
    %v736 = vperm.slane %v734, 0
    %v739 = vsel %vm280, %v728, 0
    %v742 = vsel %vm280, %v729, 0
    %744 = vmatpush.msra.mxu0 0.0
    %745 = vmatpush.msra.mxu0 0.0
    %746 = vmatpush.msra.mxu0 0.0
    %747 = vmatpush.msra.mxu0 0.0
    %748 = vmatpush.msra.mxu0 0.0
    %749 = vmatpush.msra.mxu0 0.0
    %750 = vmatpush.msra.mxu0 0.0
    %751 = vmatpush.msra.mxu0 0.0
    %752 = vmatpush.msra.mxu0 0.0
    %753 = vmatpush.msra.mxu0 0.0
    %754 = vmatpush.msra.mxu0 0.0
    %755 = vmatpush.msra.mxu0 0.0
    %756 = vmatpush.msra.mxu0 %v733
    %757 = vmatpush.msra.mxu0 %v732
    %758 = vmatpush.msra.mxu0 %v731
    %759 = vmatpush.msra.mxu0 %v730
    %760 = vmatmul.f32.gmra.mxu0 %v739
    %v761 = vpop.f32.mrf.mxu0
    %v762 = vadd.f32 %v736, %v761
    %763 = vmatmul.f32.gmra.mxu0 %v742
    %v764 = vpop.f32.mrf.mxu0
    %v765 = vadd.f32 %v736, %v764
    %766 = vdwg.mxu0
    %v767 = vmul.f32 %v762, %v762
    %v768 = vmul.f32 %v765, %v765
    %v769 = vmul.f32 %v762, %v767
    %v770 = vmul.f32 %v765, %v768
    %v771 = vmul.f32 %v769, 0.044715
    %v772 = vmul.f32 %v770, 0.044715
    %v773 = vadd.f32 %v762, %v771
    %v774 = vadd.f32 %v765, %v772
    %v775 = vmul.f32 %v773, 0.7978846
    %v776 = vmul.f32 %v774, 0.7978846
    %v777 = vtanh.pop %v775
    %v778 = vtanh.pop %v776
    %v779 = vadd.f32 %v777, 1.0
    %v780 = vadd.f32 %v778, 1.0
    %v781 = vmul.f32 %v779, 0.5
    %v782 = vmul.f32 %v780, 0.5
    %v783 = vmul.f32 %v762, %v781
    %v784 = vmul.f32 %v765, %v782
    %v785 = vld [vmem:[%s17] sm:$0xff]
    %v786 = vld [vmem:[%s17 + $0x8] sm:$0xff]
    %v787 = vld [vmem:[%s17 + $0x10] sm:$0xff]
    %v788 = vld [vmem:[%s17 + $0x18] sm:$0xff]
    %v789 = vld [vmem:[%s17 + $0x20] sm:$0xff]
    %v790 = vld [vmem:[%s17 + $0x28] sm:$0xff]
    %v791 = vld [vmem:[%s17 + $0x30] sm:$0xff]
    %v792 = vld [vmem:[%s17 + $0x38] sm:$0xff]
    %v793 = vld [vmem:[#allocation13] sm:$0x1]
    %v795 = vperm.slane %v793, 0
    %v798 = vsel %vm519, %v783, 0
    %v801 = vsel %vm519, %v784, 0
    %803 = vmatpush.msra.mxu0 0.0
    %804 = vmatpush.msra.mxu0 0.0
    %805 = vmatpush.msra.mxu0 0.0
    %806 = vmatpush.msra.mxu0 0.0
    %807 = vmatpush.msra.mxu0 0.0
    %808 = vmatpush.msra.mxu0 0.0
    %809 = vmatpush.msra.mxu0 0.0
    %810 = vmatpush.msra.mxu0 0.0
    %811 = vmatpush.msra.mxu0 %v792
    %812 = vmatpush.msra.mxu0 %v791
    %813 = vmatpush.msra.mxu0 %v790
    %814 = vmatpush.msra.mxu0 %v789
    %815 = vmatpush.msra.mxu0 %v788
    %816 = vmatpush.msra.mxu0 %v787
    %817 = vmatpush.msra.mxu0 %v786
    %818 = vmatpush.msra.mxu0 %v785
    %819 = vmatmul.f32.gmra.mxu0 %v798
    %v820 = vpop.f32.mrf.mxu0
    %v821 = vadd.f32 %v795, %v820
    %822 = vmatmul.f32.gmra.mxu0 %v801
    %v823 = vpop.f32.mrf.mxu0
    %v824 = vadd.f32 %v795, %v823
    %825 = vdwg.mxu0
    %v826 = vadd.f32 %v821, %v728
    %v827 = vadd.f32 %v824, %v729
    %v828 = vld [vmem:[#allocation14] sm:$0x1]
    %v829 = vld [vmem:[#allocation16] sm:$0x1]
    %v830 = vsel %vm280, %v826, 0.0
    %831 = vadd.xlane.f32.xlu0 %v830
    %v832 = vpop.xlane.xlu0 %831
    %v833 = vsel %vm280, %v827, 0.0
    %834 = vadd.xlane.f32.xlu0 %v833
    %v835 = vpop.xlane.xlu0 %834
    %v836 = vmul.f32 %v832, %v681
    %v837 = vmul.f32 %v835, %v681
    %v838 = vsub.f32 %v826, %v836
    %v839 = vsub.f32 %v827, %v837
    %v840 = vmul.f32 %v838, %v838
    %v841 = vmul.f32 %v839, %v839
    %v842 = vsel %vm280, %v840, 0.0
    %843 = vadd.xlane.f32.xlu0 %v842
    %v844 = vpop.xlane.xlu0 %843
    %v845 = vsel %vm280, %v841, 0.0
    %846 = vadd.xlane.f32.xlu0 %v845
    %v847 = vpop.xlane.xlu0 %846
    %v848 = vmul.f32 %v844, %v681
    %v849 = vmul.f32 %v847, %v681
    %v850 = vadd.f32 %v848, 1e-12
    %v851 = vadd.f32 %v849, 1e-12
    %v852 = vrsqrt.pop %v850
    %v853 = vmul.f32 %v852, %v850
    %v854 = vmul.f32 %v853, %v852
    %v855 = vmul.f32 0.5, %v854
    %v856 = vsub.f32 1.5, %v855
    %v857 = vmul.f32 %v852, %v856
    %vm858 = vweird.f32 %v850
    %vm859 = vweird.f32 %v852
    %vm860 = vmor %vm858, %vm859
    %v861 = vsel %vm860, %v852, %v857
    %v862 = vrsqrt.pop %v851
    %v863 = vmul.f32 %v862, %v851
    %v864 = vmul.f32 %v863, %v862
    %v865 = vmul.f32 0.5, %v864
    %v866 = vsub.f32 1.5, %v865
    %v867 = vmul.f32 %v862, %v866
    %vm868 = vweird.f32 %v851
    %vm869 = vweird.f32 %v862
    %vm870 = vmor %vm868, %vm869
    %v871 = vsel %vm870, %v862, %v867
    %v872 = vmul.f32 %v838, %v861
    %v873 = vmul.f32 %v839, %v871
    %v875 = vperm.slane %v828, 0
    %v877 = vmul.f32 %v872, %v875
    %v878 = vmul.f32 %v873, %v875
    %v880 = vperm.slane %v829, 0
    %v882 = vadd.f32 %v877, %v880
    %v883 = vadd.f32 %v878, %v880
    %v884 = vld [vmem:[#allocation17] sm:$0xff]
    %v885 = vld [vmem:[#allocation17 + $0x8] sm:$0xff]
    %v886 = vld [vmem:[#allocation17 + $0x10] sm:$0xff]
    %v887 = vld [vmem:[#allocation17 + $0x18] sm:$0xff]
    %v888 = vld [vmem:[#allocation19] sm:$0x1]
    %v890 = vperm.slane %v888, 0
    %892 = vmatpush.msra.mxu0 0.0
    %893 = vmatpush.msra.mxu0 0.0
    %894 = vmatpush.msra.mxu0 0.0
    %895 = vmatpush.msra.mxu0 0.0
    %896 = vmatpush.msra.mxu0 0.0
    %897 = vmatpush.msra.mxu0 0.0
    %898 = vmatpush.msra.mxu0 0.0
    %899 = vmatpush.msra.mxu0 0.0
    %900 = vmatpush.msra.mxu0 0.0
    %901 = vmatpush.msra.mxu0 0.0
    %902 = vmatpush.msra.mxu0 0.0
    %903 = vmatpush.msra.mxu0 0.0
    %904 = vmatpush.msra.mxu0 %v887
    %905 = vmatpush.msra.mxu0 %v886
    %906 = vmatpush.msra.mxu0 %v885
    %907 = vmatpush.msra.mxu0 %v884
    %908 = vmatmul.f32.gmra.mxu0 %v739
    %v909 = vpop.f32.mrf.mxu0
    %v910 = vadd.f32 %v890, %v909
    %911 = vmatmul.f32.gmra.mxu0 %v742
    %v912 = vpop.f32.mrf.mxu0
    %v913 = vadd.f32 %v890, %v912
    %914 = vdwg.mxu0
    %v915 = vmul.f32 %v910, %v910
    %v916 = vmul.f32 %v913, %v913
    %v917 = vmul.f32 %v910, %v915
    %v918 = vmul.f32 %v913, %v916
    %v919 = vmul.f32 %v917, 0.044715
    %v920 = vmul.f32 %v918, 0.044715
    %v921 = vadd.f32 %v910, %v919
    %v922 = vadd.f32 %v913, %v920
    %v923 = vmul.f32 %v921, 0.7978846
    %v924 = vmul.f32 %v922, 0.7978846
    %v925 = vtanh.pop %v923
    %v926 = vtanh.pop %v924
    %v927 = vadd.f32 %v925, 1.0
    %v928 = vadd.f32 %v926, 1.0
    %v929 = vmul.f32 %v927, 0.5
    %v930 = vmul.f32 %v928, 0.5
    %v931 = vmul.f32 %v910, %v929
    %v932 = vmul.f32 %v913, %v930
    %v933 = vld [vmem:[%s23] sm:$0xff]
    %v934 = vld [vmem:[%s23 + $0x8] sm:$0xff]
    %v935 = vmul.f32 %v931, %v933
    %v936 = vmul.f32 %v932, %v934
    %v937 = vld [vmem:[#allocation20] sm:$0xff]
    %v938 = vld [vmem:[#allocation20 + $0x8] sm:$0xff]
    %v939 = vld [vmem:[#allocation20 + $0x10] sm:$0xff]
    %v940 = vld [vmem:[#allocation20 + $0x18] sm:$0xff]
    %v941 = vld [vmem:[#allocation22] sm:$0xff]
    %v942 = vld [vmem:[#allocation22 + $0x8] sm:$0xff]
    %v944 = vsel %vm280, %v935, 0
    %v947 = vsel %vm280, %v936, 0
    %949 = vmatpush.msra.mxu0 0.0
    %950 = vmatpush.msra.mxu0 0.0
    %951 = vmatpush.msra.mxu0 0.0
    %952 = vmatpush.msra.mxu0 0.0
    %953 = vmatpush.msra.mxu0 0.0
    %954 = vmatpush.msra.mxu0 0.0
    %955 = vmatpush.msra.mxu0 0.0
    %956 = vmatpush.msra.mxu0 0.0
    %957 = vmatpush.msra.mxu0 0.0
    %958 = vmatpush.msra.mxu0 0.0
    %959 = vmatpush.msra.mxu0 0.0
    %960 = vmatpush.msra.mxu0 0.0
    %961 = vmatpush.msra.mxu0 %v940
    %962 = vmatpush.msra.mxu0 %v939
    %963 = vmatpush.msra.mxu0 %v938
    %964 = vmatpush.msra.mxu0 %v937
    %965 = vmatmul.f32.gmra.mxu0 %v944
    %v966 = vpop.f32.mrf.mxu0
    %v967 = vadd.f32 %v941, %v966
    %968 = vmatmul.f32.gmra.mxu0 %v947
    %v969 = vpop.f32.mrf.mxu0
    %v970 = vadd.f32 %v942, %v969
    %971 = vdwg.mxu0
    %v972 = vmul.f32 %v967, 2.0
    %v973 = vmul.f32 %v970, 2.0
    %v974 = vadd.f32 %v882, %v972
    %v975 = vadd.f32 %v883, %v973
    %976 = vst.msk [vmem:[#allocation23] sm:$0xff] %vm280, %v974
    %977 = vst.msk [vmem:[#allocation23 + $0x8] sm:$0xff] %vm280, %v975
    // Predicated region
    $region158: #{tpu_custom_call.1} parent=1 // pred_check
      _
    $region159: #{tpu_custom_call.1} parent=1 // pred_check_branch
      %979 = sbr.rel (0) target = $region161
    $region160: #{tpu_custom_call.1} parent=1 // pred_region
      %981 = vsyncadd [#allocation4], 0
      %s982 = sshll.u32 [#allocation23], 4
      %s983 = int_to_ptr.vmem [resolvable:$true] %s982
      %s984 = sshll.u32 %s26, 4
      %s985 = int_to_ptr.hbm [resolvable:$true] %s984
      %990 = dma.vmem_to_hbm [thread:$0]  %s983, 256, %s985, [#allocation4], 128, 128, 8
    $region161: #{tpu_custom_call.1} parent=1 // pred_fallthru
      _
    // Predicated region
    $region162: #{tpu_custom_call.1} parent=1 // pred_check
      _
    $region163: #{tpu_custom_call.1} parent=1 // pred_check_branch
      %992 = sbr.rel (0) target = $region165
    $region164: #{tpu_custom_call.1} parent=1 // pred_region
      %994 = dma.done [#allocation4], 256
    $region165: #{tpu_custom_call.1} parent=1 // pred_fallthru
      _
    %995 = vsyncpa [#allocation3], 1
    %996 = vsyncpa [#allocation6], 1
    %997 = vsyncpa [#allocation9], 1
    %998 = vsyncpa [#allocation12], 1
    %999 = vsyncpa [#allocation15], 1
    %1000 = vsyncpa [#allocation18], 1
    %1001 = vsyncpa [#allocation21], 1
    %1002 = vsyncpa [#allocation4], 1

</llo_original>
